<compile_context>
chip_gen: v7x
topology: tpu7x:2x2x1
jax: 0.10.0
libtpu: 0.0.40
codegen_flags: <defaults>
</compile_context>

<pallas_src>
import jax
import jax.numpy as jnp
from jax import lax
from jax.experimental import pallas as pl
from jax.experimental.pallas import tpu as pltpu


# ----------------------------------------------------------------------------- #
# Kernel
# ----------------------------------------------------------------------------- #
def _linear_attention_kernel(qm_ref, km_ref, q_ref, k_ref, v_ref,
                             bd_ref, padk_ref,
                             wq_ref, bq_ref, wk_ref, bk_ref,
                             wv_ref, bv_ref, wp_ref, bp_ref,
                             o_ref):
    g, sq, L = q_ref.shape          # g lane-groups per tile, each packing G batches
    sk = k_ref.shape[1]
    f32 = jnp.float32
    rows_q = g * sq
    rows_k = g * sk

    bd = bd_ref[...]                # (L, L) block-diagonal head/batch 0/1 mask

    # Flattened row blocks.  Layout-free when sq/sk are multiples of 8 (f32
    # sublane); otherwise correct but Mosaic inserts a relayout copy.
    q = q_ref[...].reshape(rows_q, L)
    k = k_ref[...].reshape(rows_k, L)
    v = v_ref[...].reshape(rows_k, L)
    qm = qm_ref[...].reshape(rows_q, L).astype(f32)
    km = km_ref[...].reshape(rows_k, L).astype(f32)

    # Four projections.  Weights are pre-transposed + block-diagonalized in the
    # wrapper; with compute_dtype=bf16 these are bf16 x bf16 -> f32 MXU matmuls.
    qp = jnp.dot(q, wq_ref[...], preferred_element_type=f32) + bq_ref[...]
    kp = jnp.dot(k, wk_ref[...], preferred_element_type=f32) + bk_ref[...]
    vp = jnp.dot(v, wv_ref[...], preferred_element_type=f32) + bv_ref[...]

    def head_softmax(x):
        # Padded rows were zero-filled (not -1e9-filled) before projection, so all
        # logits here are activation-scale; a row-global max is then a valid and
        # safe per-head shift (softmax is shift-invariant per head; assumes the
        # per-row logit spread stays within exp's f32 range, which any sane
        # activation scale satisfies).  Per-head sums go through one MXU matmul
        # with the block-diagonal mask; reciprocal runs on the EUP slot.
        m = jnp.max(x, axis=-1, keepdims=True)
        e = jnp.exp(x - m)
        denom = jnp.dot(e, bd, preferred_element_type=f32)
        return e * pl.reciprocal(denom, approx=True)

    qs = head_softmax(qp)                                   # (rows_q, L)
    ks = head_softmax(kp)                                   # (rows_k, L)
    # Padded key rows must reproduce softmax(proj(-1e9 * ones)) exactly — they feed
    # k_cumsum and (via the value bias) the context.  That constant per-head
    # distribution is precomputed exactly (f32) in the wrapper.
    ks = km * ks + (1.0 - km) * padk_ref[...]

    # ---- linear-attention contraction -------------------------------------- #
    if g == 1:
        kc = jnp.sum(ks, axis=0, keepdims=True)                           # (1, L)
        # context = ks^T @ vp (contract the Sk axis; no transpose materialized);
        # cross-head / cross-batch terms zeroed by the block-diagonal mask.
        context = lax.dot_general(ks, vp, (((0,), (0,)), ((), ())),
                                  preferred_element_type=f32) * bd        # (L, L)
        denom = jnp.dot(qs * kc, bd, preferred_element_type=f32)          # (rows_q, L)
        num = jnp.dot(qs, context, preferred_element_type=f32)            # (rows_q, L)
    else:
        # Batched over the tile's lane-groups (no unrolled Python loop, no concat).
        qs3 = qs.reshape(g, sq, L)
        ks3 = ks.reshape(g, sk, L)
        vp3 = vp.reshape(g, sk, L)
        kc = jnp.sum(ks3, axis=1, keepdims=True)                          # (g, 1, L)
        context = lax.dot_general(ks3, vp3, (((1,), (1,)), ((0,), (0,))),
                                  preferred_element_type=f32) * bd        # (g, L, L)
        denom = jnp.dot((qs3 * kc).reshape(rows_q, L), bd,
                        preferred_element_type=f32)                       # (rows_q, L)
        num = lax.dot_general(qs3, context, (((2,), (1,)), ((0,), (0,))),
                              preferred_element_type=f32).reshape(rows_q, L)

    attn = num * pl.reciprocal(denom, approx=True) + qs    # attn_drop(p=0.0) == id

    # ---- output projection + query padding mask ---------------------------- #
    out = jnp.dot(attn, wp_ref[...], preferred_element_type=f32) + bp_ref[...]
    out = out * qm
    o_ref[...] = out.reshape(g, sq, L)


# ----------------------------------------------------------------------------- #
# Wrapper
# ----------------------------------------------------------------------------- #
def _vmem_capacity_bytes():
    try:
        return int(pltpu.get_tpu_info().vmem_capacity_bytes)
    except Exception:
        return 64 * 1024 * 1024


def _pick_groups_per_tile(n_groups, sq, sk, lanes, act_itemsize):
    """Largest group-tile whose double-buffered streams fit a VMEM budget.

    Generation aware: v5e/v6e expose 128 MiB of VMEM, v7x only 64 MiB, so the
    budget (and the tile) automatically halves on v7x.  The grid is kept >= 2
    steps (feed both v7x TensorCores) only when that does not shrink a step
    below ~2k rows; single-TC v5e/v6e prefer the big tile.
    """
    budget = _vmem_capacity_bytes() // 4
    per_group = (
        2 * act_itemsize * lanes * (2 * sq + 3 * sk)   # double-buffered q/qm + k/v/km
        + 2 * 4 * lanes * sq                            # double-buffered f32 out tile
        + 4 * lanes * lanes                             # f32 context intermediate
    )
    cap = max(1, budget // max(per_group, 1))
    divisors = [d for d in range(1, n_groups + 1) if n_groups % d == 0]
    fitting = [d for d in divisors if d <= cap] or [1]
    tile = fitting[-1]
    if n_groups // tile < 2:
        smaller = [d for d in fitting if n_groups // d >= 2 and d * sq >= 2048]
        if smaller:
            tile = smaller[-1]
    return tile


def linear_attention(q, k, v, q_mask, k_mask, params, num_heads, *,
                     compute_dtype=jnp.bfloat16, groups_per_tile=None):
    """Forward pass of LinearAttention (dropout p=0.0) as one fused Pallas kernel."""
    B, Sq, D = q.shape
    _, Sk, _ = k.shape
    assert D % num_heads == 0
    Dh = D // num_heads
    f32 = jnp.float32

    q = q.astype(f32)
    k = k.astype(f32)
    v = v.astype(f32)
    if q_mask is None:
        q_mask = jnp.ones((B, Sq, 1), f32)
    if k_mask is None:
        k_mask = jnp.ones((B, Sk, 1), f32)
    qm = q_mask.astype(f32)
    km = k_mask.astype(f32)

    # ---- lane packing: G batch elements share one (<=128)-lane row ----------- #
    G = 1
    for cand in range(min(B, max(1, 128 // D)), 0, -1):
        if B % cand == 0:
            G = cand
            break
    L = G * D
    n_groups = B // G

    wq, bq, wk, bk, wv, bv, wp, bp = params
    bq = jnp.reshape(bq, (1, D)).astype(f32)
    bk = jnp.reshape(bk, (1, D)).astype(f32)
    bv = jnp.reshape(bv, (1, D)).astype(f32)
    bp = jnp.reshape(bp, (1, D)).astype(f32)

    def block_diag_wt(w):
        # PyTorch (out, in) weight -> packed (L, L) block-diag of W^T (x @ W^T).
        return jnp.kron(jnp.eye(G, dtype=f32), jnp.transpose(w).astype(f32))

    wq_bd = block_diag_wt(wq).astype(compute_dtype)
    wk_bd = block_diag_wt(wk).astype(compute_dtype)
    wv_bd = block_diag_wt(wv).astype(compute_dtype)
    wp_bd = block_diag_wt(wp)                       # f32 (its lhs is an f32 intermediate)
    bq_t = jnp.tile(bq, (1, G))
    bk_t = jnp.tile(bk, (1, G))
    bv_t = jnp.tile(bv, (1, G))
    bp_t = jnp.tile(bp, (1, G))

    # (L, L) block-diagonal 0/1 mask at head granularity: zeroes both cross-head
    # and cross-batch terms of the packed contractions.
    head_id = jnp.arange(L, dtype=jnp.int32) // Dh
    bd = (head_id[:, None] == head_id[None, :]).astype(f32)

    # Exact per-head softmax of a fully padded key row: softmax(proj(-1e9 * ones)).
    pad_logits = jnp.full((1, D), -1e9, f32) @ jnp.transpose(wk).astype(f32) + bk
    pad_soft = jax.nn.softmax(pad_logits.reshape(num_heads, Dh), axis=-1).reshape(1, D)
    padk = jnp.tile(pad_soft, (1, G))

    # Pre-mask in the wrapper (padded rows -> 0).  The module's -1e9 fill is
    # reproduced exactly via `padk` for keys; padded query rows are zeroed at the
    # end, so their fill value is irrelevant to the output.
    q_in = q * qm
    k_in = k * km
    v_in = v * km

    def pack(x):                                    # (B, S, D) -> (B/G, S, G*D)
        s = x.shape[1]
        return x.reshape(n_groups, G, s, D).transpose(0, 2, 1, 3).reshape(n_groups, s, L)

    q_p = pack(q_in).astype(compute_dtype)
    k_p = pack(k_in).astype(compute_dtype)
    v_p = pack(v_in).astype(compute_dtype)
    qm_p = pack(jnp.broadcast_to(qm, (B, Sq, D))).astype(compute_dtype)
    km_p = pack(jnp.broadcast_to(km, (B, Sk, D))).astype(compute_dtype)

    if groups_per_tile is None:
        groups_per_tile = _pick_groups_per_tile(
            n_groups, Sq, Sk, L, jnp.dtype(compute_dtype).itemsize)
    assert n_groups % groups_per_tile == 0
    grid = (n_groups // groups_per_tile,)

    vmem_cap = _vmem_capacity_bytes()
    compiler_params = pltpu.CompilerParams(
        dimension_semantics=("parallel",),
        vmem_limit_bytes=min(int(vmem_cap * 3 // 4), 96 * 1024 * 1024),
    )

    def batched(s):
        return pl.BlockSpec((groups_per_tile, s, L), lambda i: (i, 0, 0))

    def resident(shape):
        return pl.BlockSpec(shape, lambda i: (0,) * len(shape))

    out_p = pl.pallas_call(
        _linear_attention_kernel,
        out_shape=jax.ShapeDtypeStruct((n_groups, Sq, L), f32),
        grid=grid,
        in_specs=[
            batched(Sq),                      # q padding mask (lane-expanded)
            batched(Sk),                      # key padding mask (lane-expanded)
            batched(Sq),                      # q (packed)
            batched(Sk),                      # k (packed)
            batched(Sk),                      # v (packed)
            resident((L, L)),                 # block-diagonal head/batch mask
            resident((1, L)),                 # padded-key per-head softmax constant
            resident((L, L)), resident((1, L)),   # query  W^T (block-diag), b
            resident((L, L)), resident((1, L)),   # key    W^T (block-diag), b
            resident((L, L)), resident((1, L)),   # value  W^T (block-diag), b
            resident((L, L)), resident((1, L)),   # proj   W^T (block-diag), b
        ],
        out_specs=batched(Sq),
        compiler_params=compiler_params,
    )(qm_p, km_p, q_p, k_p, v_p, bd, padk,
      wq_bd, bq_t, wk_bd, bk_t, wv_bd, bv_t, wp_bd, bp_t)

    # Unpack lanes back to (B, Sq, D).
    return out_p.reshape(n_groups, Sq, G, D).transpose(0, 2, 1, 3).reshape(B, Sq, D)


# ----------------------------------------------------------------------------- #
# Pure-JAX reference (replicates the PyTorch forward) and self-test
# ----------------------------------------------------------------------------- #
def reference(q, k, v, qm, km, params, num_heads):
    wq, bq, wk, bk, wv, bv, wp, bp = params
    neg = -1e9
    qq = q * qm + (1.0 - qm) * neg
    kk = k * km + (1.0 - km) * neg
    vv = v * km
    lin = lambda x, w, b: x @ w.T + b
    B, Sq, D = q.shape
    Sk = k.shape[1]
    Dh = D // num_heads
    qp = lin(qq, wq, bq).reshape(B, Sq, num_heads, Dh).transpose(0, 2, 1, 3)
    kp = lin(kk, wk, bk).reshape(B, Sk, num_heads, Dh).transpose(0, 2, 1, 3)
    vp = lin(vv, wv, bv).reshape(B, Sk, num_heads, Dh).transpose(0, 2, 1, 3)
    qs = jax.nn.softmax(qp, axis=-1)
    ks = jax.nn.softmax(kp, axis=-1)
    k_cumsum = ks.sum(axis=-2, keepdims=True)
    a_t = 1.0 / (qs * k_cumsum).sum(axis=-1, keepdims=True)
    context = jnp.einsum('bhkd,bhke->bhde', ks, vp)
    out = jnp.einsum('bhqd,bhde->bhqe', qs, context) * a_t + qs
    out = out.transpose(0, 2, 1, 3).reshape(B, Sq, D)
    out = lin(out, wp, bp)
    return out * qm


if __name__ == "__main__":
    B, Sq, Sk, D, H = 2, 16, 8, 32, 4     # embed_dim=32, num_heads=4, dropout=0.0

    key = jax.random.PRNGKey(0)
    keys = jax.random.split(key, 13)

    q = jax.random.normal(keys[0], (B, Sq, D), jnp.float32)
    k = jax.random.normal(keys[1], (B, Sk, D), jnp.float32)
    v = jax.random.normal(keys[2], (B, Sk, D), jnp.float32)
    q_mask = (jax.random.uniform(keys[3], (B, Sq, 1)) > 0.2).astype(jnp.float32)
    k_mask = (jax.random.uniform(keys[4], (B, Sk, 1)) > 0.2).astype(jnp.float32)

    s = 0.1  # deterministic synthetic parameter init
    wq = s * jax.random.normal(keys[5], (D, D), jnp.float32)
    bq = s * jax.random.normal(keys[6], (1, D), jnp.float32)
    wk = s * jax.random.normal(keys[7], (D, D), jnp.float32)
    bk = s * jax.random.normal(keys[8], (1, D), jnp.float32)
    wv = s * jax.random.normal(keys[9], (D, D), jnp.float32)
    bv = s * jax.random.normal(keys[10], (1, D), jnp.float32)
    wp = s * jax.random.normal(keys[11], (D, D), jnp.float32)
    bp = s * jax.random.normal(keys[12], (1, D), jnp.float32)
    params = (wq, bq, wk, bk, wv, bv, wp, bp)

    ref = reference(q, k, v, q_mask, k_mask, params, H)

    # Exact path (f32 MXU feed).  Tolerance covers the EUP approximate reciprocal
    # used for the softmax denominators and a_t.
    out_f32 = jax.block_until_ready(
        linear_attention(q, k, v, q_mask, k_mask, params, H,
                         compute_dtype=jnp.float32))
    assert out_f32.shape == (B, Sq, D)
    assert jnp.allclose(out_f32, ref, atol=5e-3, rtol=5e-3), "f32 kernel/reference mismatch"

    # Default production path: bf16 activations/weights feed the MXU (perf review);
    # exp/max/reciprocal and accumulation stay f32.  bf16 input/weight quantization
    # vs. the f32 reference dominates this tolerance.
    out_bf16 = jax.block_until_ready(
        linear_attention(q, k, v, q_mask, k_mask, params, H,
                         compute_dtype=jnp.bfloat16))
    assert out_bf16.shape == (B, Sq, D)
    assert jnp.allclose(out_bf16, ref, atol=5e-2, rtol=5e-2), "bf16 kernel/reference mismatch"

    print("KERNEL_OK")
</pallas_src>

<mosaic_0001>
module attributes {stable_mosaic.version = 11 : i64} {
  func.func @_linear_attention_kernel(%arg0: i32, %arg1: memref<1x16x64xf32, #tpu.memory_space<vmem>>, %arg2: memref<1x8x64xf32, #tpu.memory_space<vmem>>, %arg3: memref<1x16x64xf32, #tpu.memory_space<vmem>>, %arg4: memref<1x8x64xf32, #tpu.memory_space<vmem>>, %arg5: memref<1x8x64xf32, #tpu.memory_space<vmem>>, %arg6: memref<64x64xf32, #tpu.memory_space<vmem>>, %arg7: memref<1x64xf32, #tpu.memory_space<vmem>>, %arg8: memref<64x64xf32, #tpu.memory_space<vmem>>, %arg9: memref<1x64xf32, #tpu.memory_space<vmem>>, %arg10: memref<64x64xf32, #tpu.memory_space<vmem>>, %arg11: memref<1x64xf32, #tpu.memory_space<vmem>>, %arg12: memref<64x64xf32, #tpu.memory_space<vmem>>, %arg13: memref<1x64xf32, #tpu.memory_space<vmem>>, %arg14: memref<64x64xf32, #tpu.memory_space<vmem>>, %arg15: memref<1x64xf32, #tpu.memory_space<vmem>>, %arg16: memref<1x16x64xf32, #tpu.memory_space<vmem>>) attributes {dimension_semantics = [#tpu.dimension_semantics<parallel>], iteration_bounds = array<i64: 1>, scalar_prefetch = 0 : i64, scratch_operands = 0 : i64, tpu.core_type = #tpu.core_type<tc>, window_params = [{transform_indices = @transform_0, window_bounds = array<i64: 1, 16, 64>}, {transform_indices = @transform_1, window_bounds = array<i64: 1, 8, 64>}, {transform_indices = @transform_2, window_bounds = array<i64: 1, 16, 64>}, {transform_indices = @transform_3, window_bounds = array<i64: 1, 8, 64>}, {transform_indices = @transform_4, window_bounds = array<i64: 1, 8, 64>}, {pipeline_mode = #tpu.pipeline_mode<synchronous>, transform_indices = @transform_5, window_bounds = array<i64: 64, 64>}, {pipeline_mode = #tpu.pipeline_mode<synchronous>, transform_indices = @transform_6, window_bounds = array<i64: 1, 64>}, {pipeline_mode = #tpu.pipeline_mode<synchronous>, transform_indices = @transform_7, window_bounds = array<i64: 64, 64>}, {pipeline_mode = #tpu.pipeline_mode<synchronous>, transform_indices = @transform_8, window_bounds = array<i64: 1, 64>}, {pipeline_mode = #tpu.pipeline_mode<synchronous>, transform_indices = @transform_9, window_bounds = array<i64: 64, 64>}, {pipeline_mode = #tpu.pipeline_mode<synchronous>, transform_indices = @transform_10, window_bounds = array<i64: 1, 64>}, {pipeline_mode = #tpu.pipeline_mode<synchronous>, transform_indices = @transform_11, window_bounds = array<i64: 64, 64>}, {pipeline_mode = #tpu.pipeline_mode<synchronous>, transform_indices = @transform_12, window_bounds = array<i64: 1, 64>}, {pipeline_mode = #tpu.pipeline_mode<synchronous>, transform_indices = @transform_13, window_bounds = array<i64: 64, 64>}, {pipeline_mode = #tpu.pipeline_mode<synchronous>, transform_indices = @transform_14, window_bounds = array<i64: 1, 64>}, {transform_indices = @transform_15, window_bounds = array<i64: 1, 16, 64>}]} {
    %c0 = arith.constant 0 : index
    %c0_0 = arith.constant 0 : index
    %0 = vector.load %arg6[%c0, %c0_0] : memref<64x64xf32, #tpu.memory_space<vmem>>, vector<64x64xf32>
    %c0_1 = arith.constant 0 : index
    %c0_2 = arith.constant 0 : index
    %c0_3 = arith.constant 0 : index
    %1 = vector.load %arg3[%c0_1, %c0_2, %c0_3] : memref<1x16x64xf32, #tpu.memory_space<vmem>>, vector<1x16x64xf32>
    %2 = vector.shape_cast %1 : vector<1x16x64xf32> to vector<16x64xf32>
    %c0_4 = arith.constant 0 : index
    %c0_5 = arith.constant 0 : index
    %c0_6 = arith.constant 0 : index
    %3 = vector.load %arg4[%c0_4, %c0_5, %c0_6] : memref<1x8x64xf32, #tpu.memory_space<vmem>>, vector<1x8x64xf32>
    %4 = vector.shape_cast %3 : vector<1x8x64xf32> to vector<8x64xf32>
    %c0_7 = arith.constant 0 : index
    %c0_8 = arith.constant 0 : index
    %c0_9 = arith.constant 0 : index
    %5 = vector.load %arg5[%c0_7, %c0_8, %c0_9] : memref<1x8x64xf32, #tpu.memory_space<vmem>>, vector<1x8x64xf32>
    %6 = vector.shape_cast %5 : vector<1x8x64xf32> to vector<8x64xf32>
    %c0_10 = arith.constant 0 : index
    %c0_11 = arith.constant 0 : index
    %c0_12 = arith.constant 0 : index
    %7 = vector.load %arg1[%c0_10, %c0_11, %c0_12] : memref<1x16x64xf32, #tpu.memory_space<vmem>>, vector<1x16x64xf32>
    %8 = vector.shape_cast %7 : vector<1x16x64xf32> to vector<16x64xf32>
    %c0_13 = arith.constant 0 : index
    %c0_14 = arith.constant 0 : index
    %c0_15 = arith.constant 0 : index
    %9 = vector.load %arg2[%c0_13, %c0_14, %c0_15] : memref<1x8x64xf32, #tpu.memory_space<vmem>>, vector<1x8x64xf32>
    %10 = vector.shape_cast %9 : vector<1x8x64xf32> to vector<8x64xf32>
    %c0_16 = arith.constant 0 : index
    %c0_17 = arith.constant 0 : index
    %11 = vector.load %arg8[%c0_16, %c0_17] : memref<64x64xf32, #tpu.memory_space<vmem>>, vector<64x64xf32>
    %cst = arith.constant dense<0.000000e+00> : vector<16x64xf32>
    %12 = tpu.matmul %2, %11, %cst {dimension_numbers = #tpu.dot_dimension_numbers<[1], [0], [0], [1], [0, 0, 1, 1], [], []>} : vector<16x64xf32>, vector<64x64xf32>, vector<16x64xf32> -> vector<16x64xf32>
    %c0_18 = arith.constant 0 : index
    %c0_19 = arith.constant 0 : index
    %13 = vector.load %arg9[%c0_18, %c0_19] : memref<1x64xf32, #tpu.memory_space<vmem>>, vector<1x64xf32>
    %14 = vector.broadcast %13 : vector<1x64xf32> to vector<16x64xf32>
    %15 = arith.addf %12, %14 : vector<16x64xf32>
    %c0_20 = arith.constant 0 : index
    %c0_21 = arith.constant 0 : index
    %16 = vector.load %arg10[%c0_20, %c0_21] : memref<64x64xf32, #tpu.memory_space<vmem>>, vector<64x64xf32>
    %cst_22 = arith.constant dense<0.000000e+00> : vector<8x64xf32>
    %17 = tpu.matmul %4, %16, %cst_22 {dimension_numbers = #tpu.dot_dimension_numbers<[1], [0], [0], [1], [0, 0, 1, 1], [], []>} : vector<8x64xf32>, vector<64x64xf32>, vector<8x64xf32> -> vector<8x64xf32>
    %c0_23 = arith.constant 0 : index
    %c0_24 = arith.constant 0 : index
    %18 = vector.load %arg11[%c0_23, %c0_24] : memref<1x64xf32, #tpu.memory_space<vmem>>, vector<1x64xf32>
    %19 = vector.broadcast %18 : vector<1x64xf32> to vector<8x64xf32>
    %20 = arith.addf %17, %19 : vector<8x64xf32>
    %c0_25 = arith.constant 0 : index
    %c0_26 = arith.constant 0 : index
    %21 = vector.load %arg12[%c0_25, %c0_26] : memref<64x64xf32, #tpu.memory_space<vmem>>, vector<64x64xf32>
    %cst_27 = arith.constant dense<0.000000e+00> : vector<8x64xf32>
    %22 = tpu.matmul %6, %21, %cst_27 {dimension_numbers = #tpu.dot_dimension_numbers<[1], [0], [0], [1], [0, 0, 1, 1], [], []>} : vector<8x64xf32>, vector<64x64xf32>, vector<8x64xf32> -> vector<8x64xf32>
    %c0_28 = arith.constant 0 : index
    %c0_29 = arith.constant 0 : index
    %23 = vector.load %arg13[%c0_28, %c0_29] : memref<1x64xf32, #tpu.memory_space<vmem>>, vector<1x64xf32>
    %24 = vector.broadcast %23 : vector<1x64xf32> to vector<8x64xf32>
    %25 = arith.addf %22, %24 : vector<8x64xf32>
    %cst_30 = arith.constant dense<0xFF800000> : vector<16xf32>
    %26 = vector.multi_reduction <maximumf>, %15, %cst_30 [1] : vector<16x64xf32> to vector<16xf32>
    %27 = vector.shape_cast %26 : vector<16xf32> to vector<16x1xf32>
    %28 = vector.broadcast %27 : vector<16x1xf32> to vector<16x64xf32>
    %29 = arith.subf %15, %28 : vector<16x64xf32>
    %30 = math.exp %29 : vector<16x64xf32>
    %cst_31 = arith.constant dense<0.000000e+00> : vector<16x64xf32>
    %31 = tpu.matmul %30, %0, %cst_31 {dimension_numbers = #tpu.dot_dimension_numbers<[1], [0], [0], [1], [0, 0, 1, 1], [], []>} : vector<16x64xf32>, vector<64x64xf32>, vector<16x64xf32> -> vector<16x64xf32>
    %32 = tpu.reciprocal %31 {approx = true} : vector<16x64xf32> -> vector<16x64xf32>
    %33 = arith.mulf %30, %32 : vector<16x64xf32>
    %cst_32 = arith.constant dense<0xFF800000> : vector<8xf32>
    %34 = vector.multi_reduction <maximumf>, %20, %cst_32 [1] : vector<8x64xf32> to vector<8xf32>
    %35 = vector.shape_cast %34 : vector<8xf32> to vector<8x1xf32>
    %36 = vector.broadcast %35 : vector<8x1xf32> to vector<8x64xf32>
    %37 = arith.subf %20, %36 : vector<8x64xf32>
    %38 = math.exp %37 : vector<8x64xf32>
    %cst_33 = arith.constant dense<0.000000e+00> : vector<8x64xf32>
    %39 = tpu.matmul %38, %0, %cst_33 {dimension_numbers = #tpu.dot_dimension_numbers<[1], [0], [0], [1], [0, 0, 1, 1], [], []>} : vector<8x64xf32>, vector<64x64xf32>, vector<8x64xf32> -> vector<8x64xf32>
    %40 = tpu.reciprocal %39 {approx = true} : vector<8x64xf32> -> vector<8x64xf32>
    %41 = arith.mulf %38, %40 : vector<8x64xf32>
    %42 = arith.mulf %10, %41 : vector<8x64xf32>
    %cst_34 = arith.constant 1.000000e+00 : f32
    %43 = vector.broadcast %cst_34 : f32 to vector<8x64xf32>
    %44 = arith.subf %43, %10 : vector<8x64xf32>
    %c0_35 = arith.constant 0 : index
    %c0_36 = arith.constant 0 : index
    %45 = vector.load %arg7[%c0_35, %c0_36] : memref<1x64xf32, #tpu.memory_space<vmem>>, vector<1x64xf32>
    %46 = vector.broadcast %45 : vector<1x64xf32> to vector<8x64xf32>
    %47 = arith.mulf %44, %46 : vector<8x64xf32>
    %48 = arith.addf %42, %47 : vector<8x64xf32>
    %cst_37 = arith.constant dense<0.000000e+00> : vector<64xf32>
    %49 = vector.multi_reduction <add>, %48, %cst_37 [0] : vector<8x64xf32> to vector<64xf32>
    %50 = vector.shape_cast %49 : vector<64xf32> to vector<1x64xf32>
    %cst_38 = arith.constant dense<0.000000e+00> : vector<64x64xf32>
    %51 = tpu.matmul %48, %25, %cst_38 {dimension_numbers = #tpu.dot_dimension_numbers<[0], [0], [1], [1], [0, 1, 1, 1], [], []>} : vector<8x64xf32>, vector<8x64xf32>, vector<64x64xf32> -> vector<64x64xf32>
    %52 = arith.mulf %51, %0 : vector<64x64xf32>
    %53 = vector.broadcast %50 : vector<1x64xf32> to vector<16x64xf32>
    %54 = arith.mulf %33, %53 : vector<16x64xf32>
    %cst_39 = arith.constant dense<0.000000e+00> : vector<16x64xf32>
    %55 = tpu.matmul %54, %0, %cst_39 {dimension_numbers = #tpu.dot_dimension_numbers<[1], [0], [0], [1], [0, 0, 1, 1], [], []>} : vector<16x64xf32>, vector<64x64xf32>, vector<16x64xf32> -> vector<16x64xf32>
    %cst_40 = arith.constant dense<0.000000e+00> : vector<16x64xf32>
    %56 = tpu.matmul %33, %52, %cst_40 {dimension_numbers = #tpu.dot_dimension_numbers<[1], [0], [0], [1], [0, 0, 1, 1], [], []>} : vector<16x64xf32>, vector<64x64xf32>, vector<16x64xf32> -> vector<16x64xf32>
    %57 = tpu.reciprocal %55 {approx = true} : vector<16x64xf32> -> vector<16x64xf32>
    %58 = arith.mulf %56, %57 : vector<16x64xf32>
    %59 = arith.addf %58, %33 : vector<16x64xf32>
    %c0_41 = arith.constant 0 : index
    %c0_42 = arith.constant 0 : index
    %60 = vector.load %arg14[%c0_41, %c0_42] : memref<64x64xf32, #tpu.memory_space<vmem>>, vector<64x64xf32>
    %cst_43 = arith.constant dense<0.000000e+00> : vector<16x64xf32>
    %61 = tpu.matmul %59, %60, %cst_43 {dimension_numbers = #tpu.dot_dimension_numbers<[1], [0], [0], [1], [0, 0, 1, 1], [], []>} : vector<16x64xf32>, vector<64x64xf32>, vector<16x64xf32> -> vector<16x64xf32>
    %c0_44 = arith.constant 0 : index
    %c0_45 = arith.constant 0 : index
    %62 = vector.load %arg15[%c0_44, %c0_45] : memref<1x64xf32, #tpu.memory_space<vmem>>, vector<1x64xf32>
    %63 = vector.broadcast %62 : vector<1x64xf32> to vector<16x64xf32>
    %64 = arith.addf %61, %63 : vector<16x64xf32>
    %65 = arith.mulf %64, %8 : vector<16x64xf32>
    %66 = vector.shape_cast %65 : vector<16x64xf32> to vector<1x16x64xf32>
    %c0_46 = arith.constant 0 : index
    %c0_47 = arith.constant 0 : index
    %c0_48 = arith.constant 0 : index
    %67 = vector.load %arg16[%c0_46, %c0_47, %c0_48] : memref<1x16x64xf32, #tpu.memory_space<vmem>>, vector<1x16x64xf32>
    tpu.vector_store %arg16[%c0_46, %c0_47, %c0_48], %66 {strides = array<i32>} : memref<1x16x64xf32, #tpu.memory_space<vmem>>, vector<1x16x64xf32>,
    return
  }
  func.func @transform_0(%arg0: i32) -> (i32, i32, i32) {
    %c0_i32 = arith.constant 0 : i32
    %c0_i32_0 = arith.constant 0 : i32
    %c0_i32_1 = arith.constant 0 : i32
    return %arg0, %c0_i32, %c0_i32_0 : i32, i32, i32
  }
  func.func @transform_1(%arg0: i32) -> (i32, i32, i32) {
    %c0_i32 = arith.constant 0 : i32
    %c0_i32_0 = arith.constant 0 : i32
    %c0_i32_1 = arith.constant 0 : i32
    return %arg0, %c0_i32, %c0_i32_0 : i32, i32, i32
  }
  func.func @transform_2(%arg0: i32) -> (i32, i32, i32) {
    %c0_i32 = arith.constant 0 : i32
    %c0_i32_0 = arith.constant 0 : i32
    %c0_i32_1 = arith.constant 0 : i32
    return %arg0, %c0_i32, %c0_i32_0 : i32, i32, i32
  }
  func.func @transform_3(%arg0: i32) -> (i32, i32, i32) {
    %c0_i32 = arith.constant 0 : i32
    %c0_i32_0 = arith.constant 0 : i32
    %c0_i32_1 = arith.constant 0 : i32
    return %arg0, %c0_i32, %c0_i32_0 : i32, i32, i32
  }
  func.func @transform_4(%arg0: i32) -> (i32, i32, i32) {
    %c0_i32 = arith.constant 0 : i32
    %c0_i32_0 = arith.constant 0 : i32
    %c0_i32_1 = arith.constant 0 : i32
    return %arg0, %c0_i32, %c0_i32_0 : i32, i32, i32
  }
  func.func @transform_5(%arg0: i32) -> (i32, i32) {
    %c0_i32 = arith.constant 0 : i32
    %c0_i32_0 = arith.constant 0 : i32
    %c0_i32_1 = arith.constant 0 : i32
    return %c0_i32, %c0_i32_0 : i32, i32
  }
  func.func @transform_6(%arg0: i32) -> (i32, i32) {
    %c0_i32 = arith.constant 0 : i32
    %c0_i32_0 = arith.constant 0 : i32
    %c0_i32_1 = arith.constant 0 : i32
    return %c0_i32, %c0_i32_0 : i32, i32
  }
  func.func @transform_7(%arg0: i32) -> (i32, i32) {
    %c0_i32 = arith.constant 0 : i32
    %c0_i32_0 = arith.constant 0 : i32
    %c0_i32_1 = arith.constant 0 : i32
    return %c0_i32, %c0_i32_0 : i32, i32
  }
  func.func @transform_8(%arg0: i32) -> (i32, i32) {
    %c0_i32 = arith.constant 0 : i32
    %c0_i32_0 = arith.constant 0 : i32
    %c0_i32_1 = arith.constant 0 : i32
    return %c0_i32, %c0_i32_0 : i32, i32
  }
  func.func @transform_9(%arg0: i32) -> (i32, i32) {
    %c0_i32 = arith.constant 0 : i32
    %c0_i32_0 = arith.constant 0 : i32
    %c0_i32_1 = arith.constant 0 : i32
    return %c0_i32, %c0_i32_0 : i32, i32
  }
  func.func @transform_10(%arg0: i32) -> (i32, i32) {
    %c0_i32 = arith.constant 0 : i32
    %c0_i32_0 = arith.constant 0 : i32
    %c0_i32_1 = arith.constant 0 : i32
    return %c0_i32, %c0_i32_0 : i32, i32
  }
  func.func @transform_11(%arg0: i32) -> (i32, i32) {
    %c0_i32 = arith.constant 0 : i32
    %c0_i32_0 = arith.constant 0 : i32
    %c0_i32_1 = arith.constant 0 : i32
    return %c0_i32, %c0_i32_0 : i32, i32
  }
  func.func @transform_12(%arg0: i32) -> (i32, i32) {
    %c0_i32 = arith.constant 0 : i32
    %c0_i32_0 = arith.constant 0 : i32
    %c0_i32_1 = arith.constant 0 : i32
    return %c0_i32, %c0_i32_0 : i32, i32
  }
  func.func @transform_13(%arg0: i32) -> (i32, i32) {
    %c0_i32 = arith.constant 0 : i32
    %c0_i32_0 = arith.constant 0 : i32
    %c0_i32_1 = arith.constant 0 : i32
    return %c0_i32, %c0_i32_0 : i32, i32
  }
  func.func @transform_14(%arg0: i32) -> (i32, i32) {
    %c0_i32 = arith.constant 0 : i32
    %c0_i32_0 = arith.constant 0 : i32
    %c0_i32_1 = arith.constant 0 : i32
    return %c0_i32, %c0_i32_0 : i32, i32
  }
  func.func @transform_15(%arg0: i32) -> (i32, i32, i32) {
    %c0_i32 = arith.constant 0 : i32
    %c0_i32_0 = arith.constant 0 : i32
    %c0_i32_1 = arith.constant 0 : i32
    return %arg0, %c0_i32, %c0_i32_0 : i32, i32, i32
  }
}

</mosaic_0001>

<llo_original>
// kernel: tpu_custom_call.1
$region0: #{tpu_custom_call.1}
  #allocation0 [shape = 'u32[]', space=smem, size = 0x4, offset = 0x4, fixed_abs, tag = 'smem constant byte address 0x4 - core index']
  #allocation1 [shape = 'u32[144,128]{1,0:T(1,128)}', space=vmem, size = 0x12000, scoped, tag = 'internal scratch']
  %s0 = inlined_call_operand.hbm [shape: f32[1,16,64], index: 0, kind: input, shape index: {}]
  %s1 = inlined_call_operand.hbm [shape: f32[1,8,64], index: 1, kind: input, shape index: {}]
  %s2 = inlined_call_operand.hbm [shape: f32[1,16,64], index: 2, kind: input, shape index: {}]
  %s3 = inlined_call_operand.vmem [shape: f32[1,8,64], index: 3, kind: input, shape index: {}]
  %s4 = inlined_call_operand.hbm [shape: f32[1,8,64], index: 4, kind: input, shape index: {}]
  %s5 = inlined_call_operand.hbm [shape: f32[64,64], index: 5, kind: input, shape index: {}]
  %s6 = inlined_call_operand.vmem [shape: f32[1,64], index: 6, kind: input, shape index: {}]
  %s7 = inlined_call_operand.hbm [shape: f32[64,64], index: 7, kind: input, shape index: {}]
  %s8 = inlined_call_operand.vmem [shape: f32[1,64], index: 8, kind: input, shape index: {}]
  %s9 = inlined_call_operand.hbm [shape: f32[64,64], index: 9, kind: input, shape index: {}]
  %s10 = inlined_call_operand.vmem [shape: f32[1,64], index: 10, kind: input, shape index: {}]
  %s11 = inlined_call_operand.hbm [shape: f32[64,64], index: 11, kind: input, shape index: {}]
  %s12 = inlined_call_operand.vmem [shape: f32[1,64], index: 12, kind: input, shape index: {}]
  %s13 = inlined_call_operand.hbm [shape: f32[64,64], index: 13, kind: input, shape index: {}]
  %s14 = inlined_call_operand.vmem [shape: f32[1,64], index: 14, kind: input, shape index: {}]
  %s15 = inlined_call_operand.hbm [shape: f32[1,16,64], index: 15, kind: output, shape index: {}]
  %s16 = sld [smem:[#allocation0]]
  $region106: #{tpu_custom_call.1} parent=0
    _
  %s18 = ssub.s32 1, %s16
  %s19 = scalar_select 0, %s18, %s16
  $region1: #{tpu_custom_call.1} parent=0
    #allocation2 [shape = 'u8[8192]{0}', space=vmem, size = 0x2000, scoped, tag = 'input window, operand 0, single buffered']
    #allocation3 [shape = 's32[1]{0}', space=sflag, size = 0x4, scoped, tag = 'scoped memory for tpu_custom_call.1']
    #allocation4 [shape = 's32[1]{0}', space=sflag, size = 0x4, scoped, tag = 'scoped memory for tpu_custom_call.1']
    #allocation5 [shape = 'u8[4096]{0}', space=vmem, size = 0x1000, scoped, tag = 'input window, operand 1, single buffered']
    #allocation6 [shape = 's32[1]{0}', space=sflag, size = 0x4, scoped, tag = 'scoped memory for tpu_custom_call.1']
    #allocation7 [shape = 'u8[8192]{0}', space=vmem, size = 0x2000, scoped, tag = 'input window, operand 2, single buffered']
    #allocation8 [shape = 'u8[4096]{0}', space=vmem, size = 0x1000, scoped, tag = 'input window, operand 4, single buffered']
    #allocation9 [shape = 's32[1]{0}', space=sflag, size = 0x4, scoped, tag = 'scoped memory for tpu_custom_call.1']
    #allocation10 [shape = 'u8[32768]{0}', space=vmem, size = 0x8000, scoped, tag = 'input window, operand 5, single buffered']
    #allocation11 [shape = 'u8[32768]{0}', space=vmem, size = 0x8000, scoped, tag = 'input window, operand 7, single buffered']
    #allocation12 [shape = 's32[1]{0}', space=sflag, size = 0x4, scoped, tag = 'scoped memory for tpu_custom_call.1']
    #allocation13 [shape = 'u8[32768]{0}', space=vmem, size = 0x8000, scoped, tag = 'input window, operand 9, single buffered']
    #allocation14 [shape = 'u8[32768]{0}', space=vmem, size = 0x8000, scoped, tag = 'input window, operand 11, single buffered']
    #allocation15 [shape = 's32[1]{0}', space=sflag, size = 0x4, scoped, tag = 'scoped memory for tpu_custom_call.1']
    #allocation16 [shape = 'u8[32768]{0}', space=vmem, size = 0x8000, scoped, tag = 'input window, operand 13, single buffered']
    #allocation17 [shape = 'u8[8192]{0}', space=vmem, size = 0x2000, scoped, tag = 'output window, operand 0, single buffered']
    %20 = vsyncpa [#allocation3], 0
    %21 = vsyncpa [#allocation6], 0
    %22 = vsyncpa [#allocation9], 0
    %23 = vsyncpa [#allocation12], 0
    %24 = vsyncpa [#allocation15], 0
    %25 = vsyncpa [#allocation4], 0
    // Predicated region
    $region2: #{tpu_custom_call.1} parent=1 // pred_check
      _
    $region3: #{tpu_custom_call.1} parent=1 // pred_check_branch
      %27 = sbr.rel (0) target = $region5
    $region4: #{tpu_custom_call.1} parent=1 // pred_region
      %s29 = ssub.s32 256, 256
      %30 = vsyncadd [#allocation3], %s29
      %s31 = sshll.u32 [#allocation2], 4
      %s32 = int_to_ptr.vmem [resolvable:$true] %s31
      %37 = dma.hbm_to_vmem [thread:$0]  %s0, 256, %s32, [#allocation3], 128, 128, 8
    $region5: #{tpu_custom_call.1} parent=1 // pred_fallthru
      _
    // Predicated region
    $region6: #{tpu_custom_call.1} parent=1 // pred_check
      _
    $region7: #{tpu_custom_call.1} parent=1 // pred_check_branch
      %39 = sbr.rel (0) target = $region9
    $region8: #{tpu_custom_call.1} parent=1 // pred_region
      %s41 = ssub.s32 128, 128
      %42 = vsyncadd [#allocation6], %s41
      %s44 = sshll.u32 [#allocation5], 4
      %s45 = int_to_ptr.vmem [resolvable:$true] %s44
      %47 = dma.hbm_to_vmem [thread:$0]  %s1, 128, %s45, [#allocation6]
    $region9: #{tpu_custom_call.1} parent=1 // pred_fallthru
      _
    // Predicated region
    $region10: #{tpu_custom_call.1} parent=1 // pred_check
      _
    $region11: #{tpu_custom_call.1} parent=1 // pred_check_branch
      %49 = sbr.rel (0) target = $region13
    $region12: #{tpu_custom_call.1} parent=1 // pred_region
      %s51 = ssub.s32 256, 256
      %52 = vsyncadd [#allocation6], %s51
      %s53 = sshll.u32 [#allocation7], 4
      %s54 = int_to_ptr.vmem [resolvable:$true] %s53
      %59 = dma.hbm_to_vmem [thread:$0]  %s2, 256, %s54, [#allocation6], 128, 128, 8
    $region13: #{tpu_custom_call.1} parent=1 // pred_fallthru
      _
    // Predicated region
    $region14: #{tpu_custom_call.1} parent=1 // pred_check
      _
    $region15: #{tpu_custom_call.1} parent=1 // pred_check_branch
      %61 = sbr.rel (0) target = $region17
    $region16: #{tpu_custom_call.1} parent=1 // pred_region
      _
    $region17: #{tpu_custom_call.1} parent=1 // pred_fallthru
      _
    // Predicated region
    $region18: #{tpu_custom_call.1} parent=1 // pred_check
      _
    $region19: #{tpu_custom_call.1} parent=1 // pred_check_branch
      %63 = sbr.rel (0) target = $region21
    $region20: #{tpu_custom_call.1} parent=1 // pred_region
      %s65 = ssub.s32 128, 128
      %66 = vsyncadd [#allocation9], %s65
      %s68 = sshll.u32 [#allocation8], 4
      %s69 = int_to_ptr.vmem [resolvable:$true] %s68
      %71 = dma.hbm_to_vmem [thread:$0]  %s4, 128, %s69, [#allocation9]
    $region21: #{tpu_custom_call.1} parent=1 // pred_fallthru
      _
    // Predicated region
    $region22: #{tpu_custom_call.1} parent=1 // pred_check
      _
    $region23: #{tpu_custom_call.1} parent=1 // pred_check_branch
      %73 = sbr.rel (0) target = $region25
    $region24: #{tpu_custom_call.1} parent=1 // pred_region
      %s75 = ssub.s32 1024, 1024
      %76 = vsyncadd [#allocation9], %s75
      %s77 = sshll.u32 [#allocation10], 4
      %s78 = int_to_ptr.vmem [resolvable:$true] %s77
      %83 = dma.hbm_to_vmem [thread:$0]  %s5, 1024, %s78, [#allocation9], 128, 128, 8
    $region25: #{tpu_custom_call.1} parent=1 // pred_fallthru
      _
    // Predicated region
    $region26: #{tpu_custom_call.1} parent=1 // pred_check
      _
    $region27: #{tpu_custom_call.1} parent=1 // pred_check_branch
      %85 = sbr.rel (0) target = $region29
    $region28: #{tpu_custom_call.1} parent=1 // pred_region
      _
    $region29: #{tpu_custom_call.1} parent=1 // pred_fallthru
      _
    // Predicated region
    $region30: #{tpu_custom_call.1} parent=1 // pred_check
      _
    $region31: #{tpu_custom_call.1} parent=1 // pred_check_branch
      %87 = sbr.rel (0) target = $region33
    $region32: #{tpu_custom_call.1} parent=1 // pred_region
      %s89 = ssub.s32 1024, 1024
      %90 = vsyncadd [#allocation12], %s89
      %s91 = sshll.u32 [#allocation11], 4
      %s92 = int_to_ptr.vmem [resolvable:$true] %s91
      %97 = dma.hbm_to_vmem [thread:$0]  %s7, 1024, %s92, [#allocation12], 128, 128, 8
    $region33: #{tpu_custom_call.1} parent=1 // pred_fallthru
      _
    // Predicated region
    $region34: #{tpu_custom_call.1} parent=1 // pred_check
      _
    $region35: #{tpu_custom_call.1} parent=1 // pred_check_branch
      %99 = sbr.rel (0) target = $region37
    $region36: #{tpu_custom_call.1} parent=1 // pred_region
      _
    $region37: #{tpu_custom_call.1} parent=1 // pred_fallthru
      _
    // Predicated region
    $region38: #{tpu_custom_call.1} parent=1 // pred_check
      _
    $region39: #{tpu_custom_call.1} parent=1 // pred_check_branch
      %101 = sbr.rel (0) target = $region41
    $region40: #{tpu_custom_call.1} parent=1 // pred_region
      %s103 = ssub.s32 1024, 1024
      %104 = vsyncadd [#allocation12], %s103
      %s105 = sshll.u32 [#allocation13], 4
      %s106 = int_to_ptr.vmem [resolvable:$true] %s105
      %111 = dma.hbm_to_vmem [thread:$0]  %s9, 1024, %s106, [#allocation12], 128, 128, 8
    $region41: #{tpu_custom_call.1} parent=1 // pred_fallthru
      _
    // Predicated region
    $region42: #{tpu_custom_call.1} parent=1 // pred_check
      _
    $region43: #{tpu_custom_call.1} parent=1 // pred_check_branch
      %113 = sbr.rel (0) target = $region45
    $region44: #{tpu_custom_call.1} parent=1 // pred_region
      _
    $region45: #{tpu_custom_call.1} parent=1 // pred_fallthru
      _
    // Predicated region
    $region46: #{tpu_custom_call.1} parent=1 // pred_check
      _
    $region47: #{tpu_custom_call.1} parent=1 // pred_check_branch
      %115 = sbr.rel (0) target = $region49
    $region48: #{tpu_custom_call.1} parent=1 // pred_region
      %s117 = ssub.s32 1024, 1024
      %118 = vsyncadd [#allocation15], %s117
      %s119 = sshll.u32 [#allocation14], 4
      %s120 = int_to_ptr.vmem [resolvable:$true] %s119
      %125 = dma.hbm_to_vmem [thread:$0]  %s11, 1024, %s120, [#allocation15], 128, 128, 8
    $region49: #{tpu_custom_call.1} parent=1 // pred_fallthru
      _
    // Predicated region
    $region50: #{tpu_custom_call.1} parent=1 // pred_check
      _
    $region51: #{tpu_custom_call.1} parent=1 // pred_check_branch
      %127 = sbr.rel (0) target = $region53
    $region52: #{tpu_custom_call.1} parent=1 // pred_region
      _
    $region53: #{tpu_custom_call.1} parent=1 // pred_fallthru
      _
    // Predicated region
    $region54: #{tpu_custom_call.1} parent=1 // pred_check
      _
    $region55: #{tpu_custom_call.1} parent=1 // pred_check_branch
      %129 = sbr.rel (0) target = $region57
    $region56: #{tpu_custom_call.1} parent=1 // pred_region
      %s131 = ssub.s32 1024, 1024
      %132 = vsyncadd [#allocation15], %s131
      %s133 = sshll.u32 [#allocation16], 4
      %s134 = int_to_ptr.vmem [resolvable:$true] %s133
      %139 = dma.hbm_to_vmem [thread:$0]  %s13, 1024, %s134, [#allocation15], 128, 128, 8
    $region57: #{tpu_custom_call.1} parent=1 // pred_fallthru
      _
    // Predicated region
    $region58: #{tpu_custom_call.1} parent=1 // pred_check
      _
    $region59: #{tpu_custom_call.1} parent=1 // pred_check_branch
      %141 = sbr.rel (0) target = $region61
    $region60: #{tpu_custom_call.1} parent=1 // pred_region
      _
    $region61: #{tpu_custom_call.1} parent=1 // pred_fallthru
      _
    // Predicated region
    $region62: #{tpu_custom_call.1} parent=1 // pred_check
      _
    $region63: #{tpu_custom_call.1} parent=1 // pred_check_branch
      %143 = sbr.rel (0) target = $region65
    $region64: #{tpu_custom_call.1} parent=1 // pred_region
      %144 = dma.done [#allocation3], 256
    $region65: #{tpu_custom_call.1} parent=1 // pred_fallthru
      _
    // Predicated region
    $region66: #{tpu_custom_call.1} parent=1 // pred_check
      _
    $region67: #{tpu_custom_call.1} parent=1 // pred_check_branch
      %146 = sbr.rel (0) target = $region69
    $region68: #{tpu_custom_call.1} parent=1 // pred_region
      %147 = dma.done [#allocation6], 128
    $region69: #{tpu_custom_call.1} parent=1 // pred_fallthru
      _
    // Predicated region
    $region70: #{tpu_custom_call.1} parent=1 // pred_check
      _
    $region71: #{tpu_custom_call.1} parent=1 // pred_check_branch
      %149 = sbr.rel (0) target = $region73
    $region72: #{tpu_custom_call.1} parent=1 // pred_region
      %150 = dma.done [#allocation6], 256
    $region73: #{tpu_custom_call.1} parent=1 // pred_fallthru
      _
    // Predicated region
    $region74: #{tpu_custom_call.1} parent=1 // pred_check
      _
    $region75: #{tpu_custom_call.1} parent=1 // pred_check_branch
      %152 = sbr.rel (0) target = $region77
    $region76: #{tpu_custom_call.1} parent=1 // pred_region
      %153 = dma.done [#allocation9], 128
    $region77: #{tpu_custom_call.1} parent=1 // pred_fallthru
      _
    // Predicated region
    $region78: #{tpu_custom_call.1} parent=1 // pred_check
      _
    $region79: #{tpu_custom_call.1} parent=1 // pred_check_branch
      %155 = sbr.rel (0) target = $region81
    $region80: #{tpu_custom_call.1} parent=1 // pred_region
      %156 = dma.done [#allocation9], 1024
    $region81: #{tpu_custom_call.1} parent=1 // pred_fallthru
      _
    // Predicated region
    $region82: #{tpu_custom_call.1} parent=1 // pred_check
      _
    $region83: #{tpu_custom_call.1} parent=1 // pred_check_branch
      %158 = sbr.rel (0) target = $region85
    $region84: #{tpu_custom_call.1} parent=1 // pred_region
      %159 = dma.done [#allocation12], 1024
    $region85: #{tpu_custom_call.1} parent=1 // pred_fallthru
      _
    // Predicated region
    $region86: #{tpu_custom_call.1} parent=1 // pred_check
      _
    $region87: #{tpu_custom_call.1} parent=1 // pred_check_branch
      %161 = sbr.rel (0) target = $region89
    $region88: #{tpu_custom_call.1} parent=1 // pred_region
      %162 = dma.done [#allocation12], 1024
    $region89: #{tpu_custom_call.1} parent=1 // pred_fallthru
      _
    // Predicated region
    $region90: #{tpu_custom_call.1} parent=1 // pred_check
      _
    $region91: #{tpu_custom_call.1} parent=1 // pred_check_branch
      %164 = sbr.rel (0) target = $region93
    $region92: #{tpu_custom_call.1} parent=1 // pred_region
      %165 = dma.done [#allocation15], 1024
    $region93: #{tpu_custom_call.1} parent=1 // pred_fallthru
      _
    // Predicated region
    $region94: #{tpu_custom_call.1} parent=1 // pred_check
      _
    $region95: #{tpu_custom_call.1} parent=1 // pred_check_branch
      %167 = sbr.rel (0) target = $region97
    $region96: #{tpu_custom_call.1} parent=1 // pred_region
      %168 = dma.done [#allocation15], 1024
    $region97: #{tpu_custom_call.1} parent=1 // pred_fallthru
      _
    %v169 = vld [vmem:[#allocation10] sm:$0xff]
    %v170 = vld [vmem:[#allocation10 + $0x8] sm:$0xff]
    %v171 = vld [vmem:[#allocation10 + $0x10] sm:$0xff]
    %v172 = vld [vmem:[#allocation10 + $0x18] sm:$0xff]
    %v173 = vld [vmem:[#allocation10 + $0x20] sm:$0xff]
    %v174 = vld [vmem:[#allocation10 + $0x28] sm:$0xff]
    %v175 = vld [vmem:[#allocation10 + $0x30] sm:$0xff]
    %v176 = vld [vmem:[#allocation10 + $0x38] sm:$0xff]
    %v177 = vld [vmem:[#allocation7] sm:$0xff]
    %v178 = vld [vmem:[#allocation7 + $0x8] sm:$0xff]
    %v179 = vld [vmem:[%s3] sm:$0xff]
    %v180 = vld [vmem:[#allocation8] sm:$0xff]
    %v181 = vld [vmem:[#allocation2] sm:$0xff]
    %v182 = vld [vmem:[#allocation2 + $0x8] sm:$0xff]
    %v183 = vld [vmem:[#allocation5] sm:$0xff]
    %v184 = vld [vmem:[#allocation11] sm:$0xff]
    %v185 = vld [vmem:[#allocation11 + $0x8] sm:$0xff]
    %v186 = vld [vmem:[#allocation11 + $0x10] sm:$0xff]
    %v187 = vld [vmem:[#allocation11 + $0x18] sm:$0xff]
    %v188 = vld [vmem:[#allocation11 + $0x20] sm:$0xff]
    %v189 = vld [vmem:[#allocation11 + $0x28] sm:$0xff]
    %v190 = vld [vmem:[#allocation11 + $0x30] sm:$0xff]
    %v191 = vld [vmem:[#allocation11 + $0x38] sm:$0xff]
    %v192 = vld [vmem:[%s8] sm:$0x1]
    %v194 = vlaneseq
    %v195 = vshrl.u32 %v194, 7
    %v196 = vsub.s32 0, %v195
    %v197 = vrot.slane %v192, %v196
    %vm199 = vcmask 523264
    %v201 = vsel %vm199, %v177, 0
    %v204 = vsel %vm199, %v178, 0
    %206 = vmatprep.subr.mxu0 0.0
    %207 = vmatpush1.msra.mxu0 %v184
    %208 = vmatprep.subr.mxu0 0.0
    %209 = vmatpush1.msra.mxu0 %v185
    %210 = vmatprep.subr.mxu0 0.0
    %211 = vmatpush1.msra.mxu0 %v186
    %212 = vmatprep.subr.mxu0 0.0
    %213 = vmatpush1.msra.mxu0 %v187
    %214 = vmatprep.subr.mxu0 0.0
    %215 = vmatpush1.msra.mxu0 %v188
    %216 = vmatprep.subr.mxu0 0.0
    %217 = vmatpush1.msra.mxu0 %v189
    %218 = vmatprep.subr.mxu0 0.0
    %219 = vmatpush1.msra.mxu0 %v190
    %220 = vmatprep.subr.mxu0 0.0
    %221 = vmatpush1.msra.mxu0 %v191
    %222 = vmatprep.subr.mxu0 0.0
    %223 = vmatpush1.msra.mxu0 0.0
    %224 = vmatprep.subr.mxu0 0.0
    %225 = vmatpush1.msra.mxu0 0.0
    %226 = vmatprep.subr.mxu0 0.0
    %227 = vmatpush1.msra.mxu0 0.0
    %228 = vmatprep.subr.mxu0 0.0
    %229 = vmatpush1.msra.mxu0 0.0
    %230 = vmatprep.subr.mxu0 0.0
    %231 = vmatpush1.msra.mxu0 0.0
    %232 = vmatprep.subr.mxu0 0.0
    %233 = vmatpush1.msra.mxu0 0.0
    %234 = vmatprep.subr.mxu0 0.0
    %235 = vmatpush1.msra.mxu0 0.0
    %236 = vmatprep.subr.mxu0 0.0
    %237 = vmatpush1.msra.mxu0 0.0
    %238 = vmatprep.subr.mxu0 0.0
    %239 = vmatpush1.msra.mxu0 0.0
    %240 = vmatprep.subr.mxu0 0.0
    %241 = vmatpush1.msra.mxu0 0.0
    %242 = vmatprep.subr.mxu0 0.0
    %243 = vmatpush1.msra.mxu0 0.0
    %244 = vmatprep.subr.mxu0 0.0
    %245 = vmatpush1.msra.mxu0 0.0
    %246 = vmatprep.subr.mxu0 0.0
    %247 = vmatpush1.msra.mxu0 0.0
    %248 = vmatprep.subr.mxu0 0.0
    %249 = vmatpush1.msra.mxu0 0.0
    %250 = vmatprep.subr.mxu0 0.0
    %251 = vmatpush1.msra.mxu0 0.0
    %252 = vmatprep.subr.mxu0 0.0
    %253 = vmatpush1.msra.mxu0 0.0
    %254 = vmatprep.subr.mxu0 0.0
    %255 = vmatpush1.msra.mxu0 0.0
    %256 = vmatprep.subr.mxu0 0.0
    %257 = vmatpush1.msra.mxu0 0.0
    %258 = vmatprep.subr.mxu0 0.0
    %259 = vmatpush1.msra.mxu0 0.0
    %260 = vmatprep.subr.mxu0 0.0
    %261 = vmatpush1.msra.mxu0 0.0
    %262 = vmatprep.subr.mxu0 0.0
    %263 = vmatpush1.msra.mxu0 0.0
    %264 = vmatprep.subr.mxu0 0.0
    %265 = vmatpush1.msra.mxu0 0.0
    %266 = vmatprep.subr.mxu0 0.0
    %267 = vmatpush1.msra.mxu0 0.0
    %268 = vmatprep.subr.mxu0 0.0
    %269 = vmatpush1.msra.mxu0 0.0
    %270 = vmatprep.mubr.f32.mxu0 0.0
    %271 = vmatmul.mubr.f32.gmra.mrb[0].mxu0 %v201
    %v272 = vpop.f32.mrb[0].mxu0
    %v273 = vadd.f32 %v197, %v272
    %v274 = vpop.f32.mrb[0].mxu0
    %275 = vmatprep.mubr.f32.mxu0 0.0
    %276 = vmatmul.mubr.f32.gmra.mrb[0].mxu0 %v204
    %v277 = vpop.f32.mrb[0].mxu0
    %v278 = vadd.f32 %v197, %v277
    %v279 = vpop.f32.mrb[0].mxu0
    %280 = vdwg.mxu0
    %v281 = vld [vmem:[#allocation13] sm:$0xff]
    %v282 = vld [vmem:[#allocation13 + $0x8] sm:$0xff]
    %v283 = vld [vmem:[#allocation13 + $0x10] sm:$0xff]
    %v284 = vld [vmem:[#allocation13 + $0x18] sm:$0xff]
    %v285 = vld [vmem:[#allocation13 + $0x20] sm:$0xff]
    %v286 = vld [vmem:[#allocation13 + $0x28] sm:$0xff]
    %v287 = vld [vmem:[#allocation13 + $0x30] sm:$0xff]
    %v288 = vld [vmem:[#allocation13 + $0x38] sm:$0xff]
    %v289 = vld [vmem:[%s10] sm:$0x1]
    %v291 = vlaneseq
    %v292 = vshrl.u32 %v291, 7
    %v293 = vsub.s32 0, %v292
    %v294 = vrot.slane %v289, %v293
    %v297 = vsel %vm199, %v179, 0
    %299 = vmatprep.subr.mxu0 0.0
    %300 = vmatpush1.msra.mxu0 %v281
    %301 = vmatprep.subr.mxu0 0.0
    %302 = vmatpush1.msra.mxu0 %v282
    %303 = vmatprep.subr.mxu0 0.0
    %304 = vmatpush1.msra.mxu0 %v283
    %305 = vmatprep.subr.mxu0 0.0
    %306 = vmatpush1.msra.mxu0 %v284
    %307 = vmatprep.subr.mxu0 0.0
    %308 = vmatpush1.msra.mxu0 %v285
    %309 = vmatprep.subr.mxu0 0.0
    %310 = vmatpush1.msra.mxu0 %v286
    %311 = vmatprep.subr.mxu0 0.0
    %312 = vmatpush1.msra.mxu0 %v287
    %313 = vmatprep.subr.mxu0 0.0
    %314 = vmatpush1.msra.mxu0 %v288
    %315 = vmatprep.subr.mxu0 0.0
    %316 = vmatpush1.msra.mxu0 0.0
    %317 = vmatprep.subr.mxu0 0.0
    %318 = vmatpush1.msra.mxu0 0.0
    %319 = vmatprep.subr.mxu0 0.0
    %320 = vmatpush1.msra.mxu0 0.0
    %321 = vmatprep.subr.mxu0 0.0
    %322 = vmatpush1.msra.mxu0 0.0
    %323 = vmatprep.subr.mxu0 0.0
    %324 = vmatpush1.msra.mxu0 0.0
    %325 = vmatprep.subr.mxu0 0.0
    %326 = vmatpush1.msra.mxu0 0.0
    %327 = vmatprep.subr.mxu0 0.0
    %328 = vmatpush1.msra.mxu0 0.0
    %329 = vmatprep.subr.mxu0 0.0
    %330 = vmatpush1.msra.mxu0 0.0
    %331 = vmatprep.subr.mxu0 0.0
    %332 = vmatpush1.msra.mxu0 0.0
    %333 = vmatprep.subr.mxu0 0.0
    %334 = vmatpush1.msra.mxu0 0.0
    %335 = vmatprep.subr.mxu0 0.0
    %336 = vmatpush1.msra.mxu0 0.0
    %337 = vmatprep.subr.mxu0 0.0
    %338 = vmatpush1.msra.mxu0 0.0
    %339 = vmatprep.subr.mxu0 0.0
    %340 = vmatpush1.msra.mxu0 0.0
    %341 = vmatprep.subr.mxu0 0.0
    %342 = vmatpush1.msra.mxu0 0.0
    %343 = vmatprep.subr.mxu0 0.0
    %344 = vmatpush1.msra.mxu0 0.0
    %345 = vmatprep.subr.mxu0 0.0
    %346 = vmatpush1.msra.mxu0 0.0
    %347 = vmatprep.subr.mxu0 0.0
    %348 = vmatpush1.msra.mxu0 0.0
    %349 = vmatprep.subr.mxu0 0.0
    %350 = vmatpush1.msra.mxu0 0.0
    %351 = vmatprep.subr.mxu0 0.0
    %352 = vmatpush1.msra.mxu0 0.0
    %353 = vmatprep.subr.mxu0 0.0
    %354 = vmatpush1.msra.mxu0 0.0
    %355 = vmatprep.subr.mxu0 0.0
    %356 = vmatpush1.msra.mxu0 0.0
    %357 = vmatprep.subr.mxu0 0.0
    %358 = vmatpush1.msra.mxu0 0.0
    %359 = vmatprep.subr.mxu0 0.0
    %360 = vmatpush1.msra.mxu0 0.0
    %361 = vmatprep.subr.mxu0 0.0
    %362 = vmatpush1.msra.mxu0 0.0
    %363 = vmatprep.mubr.f32.mxu0 0.0
    %364 = vmatmul.mubr.f32.gmra.mrb[0].mxu0 %v297
    %v365 = vpop.f32.mrb[0].mxu0
    %v366 = vadd.f32 %v294, %v365
    %v367 = vpop.f32.mrb[0].mxu0
    %368 = vdwg.mxu0
    %v369 = vld [vmem:[#allocation14] sm:$0xff]
    %v370 = vld [vmem:[#allocation14 + $0x8] sm:$0xff]
    %v371 = vld [vmem:[#allocation14 + $0x10] sm:$0xff]
    %v372 = vld [vmem:[#allocation14 + $0x18] sm:$0xff]
    %v373 = vld [vmem:[#allocation14 + $0x20] sm:$0xff]
    %v374 = vld [vmem:[#allocation14 + $0x28] sm:$0xff]
    %v375 = vld [vmem:[#allocation14 + $0x30] sm:$0xff]
    %v376 = vld [vmem:[#allocation14 + $0x38] sm:$0xff]
    %v377 = vld [vmem:[%s12] sm:$0x1]
    %v379 = vlaneseq
    %v380 = vshrl.u32 %v379, 7
    %v381 = vsub.s32 0, %v380
    %v382 = vrot.slane %v377, %v381
    %v385 = vsel %vm199, %v180, 0
    %387 = vmatprep.subr.mxu0 0.0
    %388 = vmatpush1.msra.mxu0 %v369
    %389 = vmatprep.subr.mxu0 0.0
    %390 = vmatpush1.msra.mxu0 %v370
    %391 = vmatprep.subr.mxu0 0.0
    %392 = vmatpush1.msra.mxu0 %v371
    %393 = vmatprep.subr.mxu0 0.0
    %394 = vmatpush1.msra.mxu0 %v372
    %395 = vmatprep.subr.mxu0 0.0
    %396 = vmatpush1.msra.mxu0 %v373
    %397 = vmatprep.subr.mxu0 0.0
    %398 = vmatpush1.msra.mxu0 %v374
    %399 = vmatprep.subr.mxu0 0.0
    %400 = vmatpush1.msra.mxu0 %v375
    %401 = vmatprep.subr.mxu0 0.0
    %402 = vmatpush1.msra.mxu0 %v376
    %403 = vmatprep.subr.mxu0 0.0
    %404 = vmatpush1.msra.mxu0 0.0
    %405 = vmatprep.subr.mxu0 0.0
    %406 = vmatpush1.msra.mxu0 0.0
    %407 = vmatprep.subr.mxu0 0.0
    %408 = vmatpush1.msra.mxu0 0.0
    %409 = vmatprep.subr.mxu0 0.0
    %410 = vmatpush1.msra.mxu0 0.0
    %411 = vmatprep.subr.mxu0 0.0
    %412 = vmatpush1.msra.mxu0 0.0
    %413 = vmatprep.subr.mxu0 0.0
    %414 = vmatpush1.msra.mxu0 0.0
    %415 = vmatprep.subr.mxu0 0.0
    %416 = vmatpush1.msra.mxu0 0.0
    %417 = vmatprep.subr.mxu0 0.0
    %418 = vmatpush1.msra.mxu0 0.0
    %419 = vmatprep.subr.mxu0 0.0
    %420 = vmatpush1.msra.mxu0 0.0
    %421 = vmatprep.subr.mxu0 0.0
    %422 = vmatpush1.msra.mxu0 0.0
    %423 = vmatprep.subr.mxu0 0.0
    %424 = vmatpush1.msra.mxu0 0.0
    %425 = vmatprep.subr.mxu0 0.0
    %426 = vmatpush1.msra.mxu0 0.0
    %427 = vmatprep.subr.mxu0 0.0
    %428 = vmatpush1.msra.mxu0 0.0
    %429 = vmatprep.subr.mxu0 0.0
    %430 = vmatpush1.msra.mxu0 0.0
    %431 = vmatprep.subr.mxu0 0.0
    %432 = vmatpush1.msra.mxu0 0.0
    %433 = vmatprep.subr.mxu0 0.0
    %434 = vmatpush1.msra.mxu0 0.0
    %435 = vmatprep.subr.mxu0 0.0
    %436 = vmatpush1.msra.mxu0 0.0
    %437 = vmatprep.subr.mxu0 0.0
    %438 = vmatpush1.msra.mxu0 0.0
    %439 = vmatprep.subr.mxu0 0.0
    %440 = vmatpush1.msra.mxu0 0.0
    %441 = vmatprep.subr.mxu0 0.0
    %442 = vmatpush1.msra.mxu0 0.0
    %443 = vmatprep.subr.mxu0 0.0
    %444 = vmatpush1.msra.mxu0 0.0
    %445 = vmatprep.subr.mxu0 0.0
    %446 = vmatpush1.msra.mxu0 0.0
    %447 = vmatprep.subr.mxu0 0.0
    %448 = vmatpush1.msra.mxu0 0.0
    %449 = vmatprep.subr.mxu0 0.0
    %450 = vmatpush1.msra.mxu0 0.0
    %451 = vmatprep.mubr.f32.mxu0 0.0
    %452 = vmatmul.mubr.f32.gmra.mrb[0].mxu0 %v385
    %v453 = vpop.f32.mrb[0].mxu0
    %v454 = vadd.f32 %v382, %v453
    %v455 = vpop.f32.mrb[0].mxu0
    %456 = vdwg.mxu0
    %v457 = vsel %vm199, %v273, -inf
    %458 = vmax.xlane.f32.xlu0 %v457
    %v459 = vpop.xlane.xlu0 %458
    %v460 = vsel %vm199, %v278, -inf
    %461 = vmax.xlane.f32.xlu0 %v460
    %v462 = vpop.xlane.xlu0 %461
    %v463 = vsub.f32 %v273, %v459
    %v464 = vsub.f32 %v278, %v462
    %v465 = vmul.f32 %v463, 1.442695
    %v466 = vpow.pop %v465
    %v467 = vmul.f32 %v464, 1.442695
    %v468 = vpow.pop %v467
    %v470 = vsel %vm199, %v466, 0
    %v473 = vsel %vm199, %v468, 0
    %475 = vmatprep.subr.mxu0 0.0
    %476 = vmatpush1.msra.mxu0 %v169
    %477 = vmatprep.subr.mxu0 0.0
    %478 = vmatpush1.msra.mxu0 %v170
    %479 = vmatprep.subr.mxu0 0.0
    %480 = vmatpush1.msra.mxu0 %v171
    %481 = vmatprep.subr.mxu0 0.0
    %482 = vmatpush1.msra.mxu0 %v172
    %483 = vmatprep.subr.mxu0 0.0
    %484 = vmatpush1.msra.mxu0 %v173
    %485 = vmatprep.subr.mxu0 0.0
    %486 = vmatpush1.msra.mxu0 %v174
    %487 = vmatprep.subr.mxu0 0.0
    %488 = vmatpush1.msra.mxu0 %v175
    %489 = vmatprep.subr.mxu0 0.0
    %490 = vmatpush1.msra.mxu0 %v176
    %491 = vmatprep.subr.mxu0 0.0
    %492 = vmatpush1.msra.mxu0 0.0
    %493 = vmatprep.subr.mxu0 0.0
    %494 = vmatpush1.msra.mxu0 0.0
    %495 = vmatprep.subr.mxu0 0.0
    %496 = vmatpush1.msra.mxu0 0.0
    %497 = vmatprep.subr.mxu0 0.0
    %498 = vmatpush1.msra.mxu0 0.0
    %499 = vmatprep.subr.mxu0 0.0
    %500 = vmatpush1.msra.mxu0 0.0
    %501 = vmatprep.subr.mxu0 0.0
    %502 = vmatpush1.msra.mxu0 0.0
    %503 = vmatprep.subr.mxu0 0.0
    %504 = vmatpush1.msra.mxu0 0.0
    %505 = vmatprep.subr.mxu0 0.0
    %506 = vmatpush1.msra.mxu0 0.0
    %507 = vmatprep.subr.mxu0 0.0
    %508 = vmatpush1.msra.mxu0 0.0
    %509 = vmatprep.subr.mxu0 0.0
    %510 = vmatpush1.msra.mxu0 0.0
    %511 = vmatprep.subr.mxu0 0.0
    %512 = vmatpush1.msra.mxu0 0.0
    %513 = vmatprep.subr.mxu0 0.0
    %514 = vmatpush1.msra.mxu0 0.0
    %515 = vmatprep.subr.mxu0 0.0
    %516 = vmatpush1.msra.mxu0 0.0
    %517 = vmatprep.subr.mxu0 0.0
    %518 = vmatpush1.msra.mxu0 0.0
    %519 = vmatprep.subr.mxu0 0.0
    %520 = vmatpush1.msra.mxu0 0.0
    %521 = vmatprep.subr.mxu0 0.0
    %522 = vmatpush1.msra.mxu0 0.0
    %523 = vmatprep.subr.mxu0 0.0
    %524 = vmatpush1.msra.mxu0 0.0
    %525 = vmatprep.subr.mxu0 0.0
    %526 = vmatpush1.msra.mxu0 0.0
    %527 = vmatprep.subr.mxu0 0.0
    %528 = vmatpush1.msra.mxu0 0.0
    %529 = vmatprep.subr.mxu0 0.0
    %530 = vmatpush1.msra.mxu0 0.0
    %531 = vmatprep.subr.mxu0 0.0
    %532 = vmatpush1.msra.mxu0 0.0
    %533 = vmatprep.subr.mxu0 0.0
    %534 = vmatpush1.msra.mxu0 0.0
    %535 = vmatprep.subr.mxu0 0.0
    %536 = vmatpush1.msra.mxu0 0.0
    %537 = vmatprep.subr.mxu0 0.0
    %538 = vmatpush1.msra.mxu0 0.0
    %539 = vmatprep.mubr.f32.mxu0 0.0
    %540 = vmatmul.mubr.f32.gmra.mrb[0].mxu0 %v470
    %v541 = vpop.f32.mrb[0].mxu0
    %v542 = vadd.f32 0.0, %v541
    %v543 = vpop.f32.mrb[0].mxu0
    %544 = vmatprep.mubr.f32.mxu0 0.0
    %545 = vmatmul.mubr.f32.gmra.mrb[0].mxu0 %v473
    %v546 = vpop.f32.mrb[0].mxu0
    %v547 = vadd.f32 0.0, %v546
    %v548 = vpop.f32.mrb[0].mxu0
    %549 = vdwg.mxu0
    %v550 = vrcp.pop %v542
    %v551 = vrcp.pop %v547
    %v552 = vmul.f32 %v466, %v550
    %v553 = vmul.f32 %v468, %v551
    %v554 = vsel %vm199, %v366, -inf
    %555 = vmax.xlane.f32.xlu0 %v554
    %v556 = vpop.xlane.xlu0 %555
    %v557 = vsub.f32 %v366, %v556
    %v558 = vmul.f32 %v557, 1.442695
    %v559 = vpow.pop %v558
    %v561 = vsel %vm199, %v559, 0
    %563 = vmatprep.subr.mxu0 0.0
    %564 = vmatpush1.msra.mxu0 %v169
    %565 = vmatprep.subr.mxu0 0.0
    %566 = vmatpush1.msra.mxu0 %v170
    %567 = vmatprep.subr.mxu0 0.0
    %568 = vmatpush1.msra.mxu0 %v171
    %569 = vmatprep.subr.mxu0 0.0
    %570 = vmatpush1.msra.mxu0 %v172
    %571 = vmatprep.subr.mxu0 0.0
    %572 = vmatpush1.msra.mxu0 %v173
    %573 = vmatprep.subr.mxu0 0.0
    %574 = vmatpush1.msra.mxu0 %v174
    %575 = vmatprep.subr.mxu0 0.0
    %576 = vmatpush1.msra.mxu0 %v175
    %577 = vmatprep.subr.mxu0 0.0
    %578 = vmatpush1.msra.mxu0 %v176
    %579 = vmatprep.subr.mxu0 0.0
    %580 = vmatpush1.msra.mxu0 0.0
    %581 = vmatprep.subr.mxu0 0.0
    %582 = vmatpush1.msra.mxu0 0.0
    %583 = vmatprep.subr.mxu0 0.0
    %584 = vmatpush1.msra.mxu0 0.0
    %585 = vmatprep.subr.mxu0 0.0
    %586 = vmatpush1.msra.mxu0 0.0
    %587 = vmatprep.subr.mxu0 0.0
    %588 = vmatpush1.msra.mxu0 0.0
    %589 = vmatprep.subr.mxu0 0.0
    %590 = vmatpush1.msra.mxu0 0.0
    %591 = vmatprep.subr.mxu0 0.0
    %592 = vmatpush1.msra.mxu0 0.0
    %593 = vmatprep.subr.mxu0 0.0
    %594 = vmatpush1.msra.mxu0 0.0
    %595 = vmatprep.subr.mxu0 0.0
    %596 = vmatpush1.msra.mxu0 0.0
    %597 = vmatprep.subr.mxu0 0.0
    %598 = vmatpush1.msra.mxu0 0.0
    %599 = vmatprep.subr.mxu0 0.0
    %600 = vmatpush1.msra.mxu0 0.0
    %601 = vmatprep.subr.mxu0 0.0
    %602 = vmatpush1.msra.mxu0 0.0
    %603 = vmatprep.subr.mxu0 0.0
    %604 = vmatpush1.msra.mxu0 0.0
    %605 = vmatprep.subr.mxu0 0.0
    %606 = vmatpush1.msra.mxu0 0.0
    %607 = vmatprep.subr.mxu0 0.0
    %608 = vmatpush1.msra.mxu0 0.0
    %609 = vmatprep.subr.mxu0 0.0
    %610 = vmatpush1.msra.mxu0 0.0
    %611 = vmatprep.subr.mxu0 0.0
    %612 = vmatpush1.msra.mxu0 0.0
    %613 = vmatprep.subr.mxu0 0.0
    %614 = vmatpush1.msra.mxu0 0.0
    %615 = vmatprep.subr.mxu0 0.0
    %616 = vmatpush1.msra.mxu0 0.0
    %617 = vmatprep.subr.mxu0 0.0
    %618 = vmatpush1.msra.mxu0 0.0
    %619 = vmatprep.subr.mxu0 0.0
    %620 = vmatpush1.msra.mxu0 0.0
    %621 = vmatprep.subr.mxu0 0.0
    %622 = vmatpush1.msra.mxu0 0.0
    %623 = vmatprep.subr.mxu0 0.0
    %624 = vmatpush1.msra.mxu0 0.0
    %625 = vmatprep.subr.mxu0 0.0
    %626 = vmatpush1.msra.mxu0 0.0
    %627 = vmatprep.mubr.f32.mxu0 0.0
    %628 = vmatmul.mubr.f32.gmra.mrb[0].mxu0 %v561
    %v629 = vpop.f32.mrb[0].mxu0
    %v630 = vadd.f32 0.0, %v629
    %v631 = vpop.f32.mrb[0].mxu0
    %632 = vdwg.mxu0
    %v633 = vrcp.pop %v630
    %v634 = vmul.f32 %v559, %v633
    %v635 = vmul.f32 %v183, %v634
    %v636 = vsub.f32 1.0, %v183
    %v637 = vld [vmem:[%s6] sm:$0x1]
    %v639 = vlaneseq
    %v640 = vshrl.u32 %v639, 7
    %v641 = vsub.s32 0, %v640
    %v642 = vrot.slane %v637, %v641
    %v644 = vmul.f32 %v636, %v642
    %v645 = vadd.f32 %v635, %v644
    %v646 = vsel %vm199, %v645, 0.0
    %v647 = vrot.slane %v646, 4
    %v648 = vadd.f32 %v646, %v647
    %v649 = vrot.slane %v648, 2
    %v650 = vadd.f32 %v648, %v649
    %v651 = vrot.slane %v650, 1
    %v652 = vadd.f32 %v650, %v651
    %653 = vxpose.xlu0.b32.start [1/16] %v645, 128
    %654 = vxpose.xlu0.b32.cont [2/16] 0.0, 128
    %655 = vxpose.xlu0.b32.cont [3/16] 0.0, 128
    %656 = vxpose.xlu0.b32.cont [4/16] 0.0, 128
    %657 = vxpose.xlu0.b32.cont [5/16] 0.0, 128
    %658 = vxpose.xlu0.b32.cont [6/16] 0.0, 128
    %659 = vxpose.xlu0.b32.cont [7/16] 0.0, 128
    %660 = vxpose.xlu0.b32.cont [8/16] 0.0, 128
    %661 = vxpose.xlu0.b32.cont [9/16] 0.0, 128
    %662 = vxpose.xlu0.b32.cont [10/16] 0.0, 128
    %663 = vxpose.xlu0.b32.cont [11/16] 0.0, 128
    %664 = vxpose.xlu0.b32.cont [12/16] 0.0, 128
    %665 = vxpose.xlu0.b32.cont [13/16] 0.0, 128
    %666 = vxpose.xlu0.b32.cont [14/16] 0.0, 128
    %667 = vxpose.xlu0.b32.cont [15/16] 0.0, 128
    %668 = vxpose.xlu0.b32.end [16/16] 0.0, 128
    %v669 = vpop.trf.xlu0
    %v670 = vpop.trf.xlu0
    %v671 = vpop.trf.xlu0
    %v672 = vpop.trf.xlu0
    %v673 = vpop.trf.xlu0
    %v674 = vpop.trf.xlu0
    %v675 = vpop.trf.xlu0
    %v676 = vpop.trf.xlu0
    %v677 = vpop.trf.xlu0
    %v678 = vpop.trf.xlu0
    %v679 = vpop.trf.xlu0
    %v680 = vpop.trf.xlu0
    %v681 = vpop.trf.xlu0
    %v682 = vpop.trf.xlu0
    %v683 = vpop.trf.xlu0
    %v684 = vpop.trf.xlu0
    %vm685 = vcmask 64512
    %v687 = vsel %vm685, %v669, 0
    %v690 = vsel %vm685, %v670, 0
    %v693 = vsel %vm685, %v671, 0
    %v696 = vsel %vm685, %v672, 0
    %v699 = vsel %vm685, %v673, 0
    %v702 = vsel %vm685, %v674, 0
    %v705 = vsel %vm685, %v675, 0
    %v708 = vsel %vm685, %v676, 0
    %710 = vmatprep.subr.mxu0 0.0
    %711 = vmatpush1.msra.mxu0 %v454
    %712 = vmatprep.subr.mxu0 0.0
    %713 = vmatpush1.msra.mxu0 0.0
    %714 = vmatprep.subr.mxu0 0.0
    %715 = vmatpush1.msra.mxu0 0.0
    %716 = vmatprep.subr.mxu0 0.0
    %717 = vmatpush1.msra.mxu0 0.0
    %718 = vmatprep.subr.mxu0 0.0
    %719 = vmatpush1.msra.mxu0 0.0
    %720 = vmatprep.subr.mxu0 0.0
    %721 = vmatpush1.msra.mxu0 0.0
    %722 = vmatprep.subr.mxu0 0.0
    %723 = vmatpush1.msra.mxu0 0.0
    %724 = vmatprep.subr.mxu0 0.0
    %725 = vmatpush1.msra.mxu0 0.0
    %726 = vmatprep.subr.mxu0 0.0
    %727 = vmatpush1.msra.mxu0 0.0
    %728 = vmatprep.subr.mxu0 0.0
    %729 = vmatpush1.msra.mxu0 0.0
    %730 = vmatprep.subr.mxu0 0.0
    %731 = vmatpush1.msra.mxu0 0.0
    %732 = vmatprep.subr.mxu0 0.0
    %733 = vmatpush1.msra.mxu0 0.0
    %734 = vmatprep.subr.mxu0 0.0
    %735 = vmatpush1.msra.mxu0 0.0
    %736 = vmatprep.subr.mxu0 0.0
    %737 = vmatpush1.msra.mxu0 0.0
    %738 = vmatprep.subr.mxu0 0.0
    %739 = vmatpush1.msra.mxu0 0.0
    %740 = vmatprep.subr.mxu0 0.0
    %741 = vmatpush1.msra.mxu0 0.0
    %742 = vmatprep.subr.mxu0 0.0
    %743 = vmatpush1.msra.mxu0 0.0
    %744 = vmatprep.subr.mxu0 0.0
    %745 = vmatpush1.msra.mxu0 0.0
    %746 = vmatprep.subr.mxu0 0.0
    %747 = vmatpush1.msra.mxu0 0.0
    %748 = vmatprep.subr.mxu0 0.0
    %749 = vmatpush1.msra.mxu0 0.0
    %750 = vmatprep.subr.mxu0 0.0
    %751 = vmatpush1.msra.mxu0 0.0
    %752 = vmatprep.subr.mxu0 0.0
    %753 = vmatpush1.msra.mxu0 0.0
    %754 = vmatprep.subr.mxu0 0.0
    %755 = vmatpush1.msra.mxu0 0.0
    %756 = vmatprep.subr.mxu0 0.0
    %757 = vmatpush1.msra.mxu0 0.0
    %758 = vmatprep.subr.mxu0 0.0
    %759 = vmatpush1.msra.mxu0 0.0
    %760 = vmatprep.subr.mxu0 0.0
    %761 = vmatpush1.msra.mxu0 0.0
    %762 = vmatprep.subr.mxu0 0.0
    %763 = vmatpush1.msra.mxu0 0.0
    %764 = vmatprep.subr.mxu0 0.0
    %765 = vmatpush1.msra.mxu0 0.0
    %766 = vmatprep.subr.mxu0 0.0
    %767 = vmatpush1.msra.mxu0 0.0
    %768 = vmatprep.subr.mxu0 0.0
    %769 = vmatpush1.msra.mxu0 0.0
    %770 = vmatprep.subr.mxu0 0.0
    %771 = vmatpush1.msra.mxu0 0.0
    %772 = vmatprep.subr.mxu0 0.0
    %773 = vmatpush1.msra.mxu0 0.0
    %774 = vmatprep.mubr.f32.mxu0 0.0
    %775 = vmatmul.mubr.f32.gmra.mrb[0].mxu0 %v687
    %v776 = vpop.f32.mrb[0].mxu0
    %v777 = vadd.f32 0.0, %v776
    %v778 = vpop.f32.mrb[0].mxu0
    %779 = vmatprep.mubr.f32.mxu0 0.0
    %780 = vmatmul.mubr.f32.gmra.mrb[0].mxu0 %v690
    %v781 = vpop.f32.mrb[0].mxu0
    %v782 = vadd.f32 0.0, %v781
    %v783 = vpop.f32.mrb[0].mxu0
    %784 = vmatprep.mubr.f32.mxu0 0.0
    %785 = vmatmul.mubr.f32.gmra.mrb[0].mxu0 %v693
    %v786 = vpop.f32.mrb[0].mxu0
    %v787 = vadd.f32 0.0, %v786
    %v788 = vpop.f32.mrb[0].mxu0
    %789 = vmatprep.mubr.f32.mxu0 0.0
    %790 = vmatmul.mubr.f32.gmra.mrb[0].mxu0 %v696
    %v791 = vpop.f32.mrb[0].mxu0
    %v792 = vadd.f32 0.0, %v791
    %v793 = vpop.f32.mrb[0].mxu0
    %794 = vmatprep.mubr.f32.mxu0 0.0
    %795 = vmatmul.mubr.f32.gmra.mrb[0].mxu0 %v699
    %v796 = vpop.f32.mrb[0].mxu0
    %v797 = vadd.f32 0.0, %v796
    %v798 = vpop.f32.mrb[0].mxu0
    %799 = vmatprep.mubr.f32.mxu0 0.0
    %800 = vmatmul.mubr.f32.gmra.mrb[0].mxu0 %v702
    %v801 = vpop.f32.mrb[0].mxu0
    %v802 = vadd.f32 0.0, %v801
    %v803 = vpop.f32.mrb[0].mxu0
    %804 = vmatprep.mubr.f32.mxu0 0.0
    %805 = vmatmul.mubr.f32.gmra.mrb[0].mxu0 %v705
    %v806 = vpop.f32.mrb[0].mxu0
    %v807 = vadd.f32 0.0, %v806
    %v808 = vpop.f32.mrb[0].mxu0
    %809 = vmatprep.mubr.f32.mxu0 0.0
    %810 = vmatmul.mubr.f32.gmra.mrb[0].mxu0 %v708
    %v811 = vpop.f32.mrb[0].mxu0
    %v812 = vadd.f32 0.0, %v811
    %v813 = vpop.f32.mrb[0].mxu0
    %814 = vdwg.mxu0
    %v815 = vmul.f32 %v777, %v169
    %v816 = vmul.f32 %v782, %v170
    %v817 = vmul.f32 %v787, %v171
    %v818 = vmul.f32 %v792, %v172
    %v819 = vmul.f32 %v797, %v173
    %v820 = vmul.f32 %v802, %v174
    %v821 = vmul.f32 %v807, %v175
    %v822 = vmul.f32 %v812, %v176
    %v823 = vmul.f32 %v552, %v652
    %v824 = vmul.f32 %v553, %v652
    %v826 = vsel %vm199, %v823, 0
    %v829 = vsel %vm199, %v824, 0
    %831 = vmatprep.subr.mxu0 0.0
    %832 = vmatpush1.msra.mxu0 %v169
    %833 = vmatprep.subr.mxu0 0.0
    %834 = vmatpush1.msra.mxu0 %v170
    %835 = vmatprep.subr.mxu0 0.0
    %836 = vmatpush1.msra.mxu0 %v171
    %837 = vmatprep.subr.mxu0 0.0
    %838 = vmatpush1.msra.mxu0 %v172
    %839 = vmatprep.subr.mxu0 0.0
    %840 = vmatpush1.msra.mxu0 %v173
    %841 = vmatprep.subr.mxu0 0.0
    %842 = vmatpush1.msra.mxu0 %v174
    %843 = vmatprep.subr.mxu0 0.0
    %844 = vmatpush1.msra.mxu0 %v175
    %845 = vmatprep.subr.mxu0 0.0
    %846 = vmatpush1.msra.mxu0 %v176
    %847 = vmatprep.subr.mxu0 0.0
    %848 = vmatpush1.msra.mxu0 0.0
    %849 = vmatprep.subr.mxu0 0.0
    %850 = vmatpush1.msra.mxu0 0.0
    %851 = vmatprep.subr.mxu0 0.0
    %852 = vmatpush1.msra.mxu0 0.0
    %853 = vmatprep.subr.mxu0 0.0
    %854 = vmatpush1.msra.mxu0 0.0
    %855 = vmatprep.subr.mxu0 0.0
    %856 = vmatpush1.msra.mxu0 0.0
    %857 = vmatprep.subr.mxu0 0.0
    %858 = vmatpush1.msra.mxu0 0.0
    %859 = vmatprep.subr.mxu0 0.0
    %860 = vmatpush1.msra.mxu0 0.0
    %861 = vmatprep.subr.mxu0 0.0
    %862 = vmatpush1.msra.mxu0 0.0
    %863 = vmatprep.subr.mxu0 0.0
    %864 = vmatpush1.msra.mxu0 0.0
    %865 = vmatprep.subr.mxu0 0.0
    %866 = vmatpush1.msra.mxu0 0.0
    %867 = vmatprep.subr.mxu0 0.0
    %868 = vmatpush1.msra.mxu0 0.0
    %869 = vmatprep.subr.mxu0 0.0
    %870 = vmatpush1.msra.mxu0 0.0
    %871 = vmatprep.subr.mxu0 0.0
    %872 = vmatpush1.msra.mxu0 0.0
    %873 = vmatprep.subr.mxu0 0.0
    %874 = vmatpush1.msra.mxu0 0.0
    %875 = vmatprep.subr.mxu0 0.0
    %876 = vmatpush1.msra.mxu0 0.0
    %877 = vmatprep.subr.mxu0 0.0
    %878 = vmatpush1.msra.mxu0 0.0
    %879 = vmatprep.subr.mxu0 0.0
    %880 = vmatpush1.msra.mxu0 0.0
    %881 = vmatprep.subr.mxu0 0.0
    %882 = vmatpush1.msra.mxu0 0.0
    %883 = vmatprep.subr.mxu0 0.0
    %884 = vmatpush1.msra.mxu0 0.0
    %885 = vmatprep.subr.mxu0 0.0
    %886 = vmatpush1.msra.mxu0 0.0
    %887 = vmatprep.subr.mxu0 0.0
    %888 = vmatpush1.msra.mxu0 0.0
    %889 = vmatprep.subr.mxu0 0.0
    %890 = vmatpush1.msra.mxu0 0.0
    %891 = vmatprep.subr.mxu0 0.0
    %892 = vmatpush1.msra.mxu0 0.0
    %893 = vmatprep.subr.mxu0 0.0
    %894 = vmatpush1.msra.mxu0 0.0
    %895 = vmatprep.mubr.f32.mxu0 0.0
    %896 = vmatmul.mubr.f32.gmra.mrb[0].mxu0 %v826
    %v897 = vpop.f32.mrb[0].mxu0
    %v898 = vadd.f32 0.0, %v897
    %v899 = vpop.f32.mrb[0].mxu0
    %900 = vmatprep.mubr.f32.mxu0 0.0
    %901 = vmatmul.mubr.f32.gmra.mrb[0].mxu0 %v829
    %v902 = vpop.f32.mrb[0].mxu0
    %v903 = vadd.f32 0.0, %v902
    %v904 = vpop.f32.mrb[0].mxu0
    %905 = vdwg.mxu0
    %v907 = vsel %vm199, %v552, 0
    %v910 = vsel %vm199, %v553, 0
    %912 = vmatprep.subr.mxu0 0.0
    %913 = vmatpush1.msra.mxu0 %v815
    %914 = vmatprep.subr.mxu0 0.0
    %915 = vmatpush1.msra.mxu0 %v816
    %916 = vmatprep.subr.mxu0 0.0
    %917 = vmatpush1.msra.mxu0 %v817
    %918 = vmatprep.subr.mxu0 0.0
    %919 = vmatpush1.msra.mxu0 %v818
    %920 = vmatprep.subr.mxu0 0.0
    %921 = vmatpush1.msra.mxu0 %v819
    %922 = vmatprep.subr.mxu0 0.0
    %923 = vmatpush1.msra.mxu0 %v820
    %924 = vmatprep.subr.mxu0 0.0
    %925 = vmatpush1.msra.mxu0 %v821
    %926 = vmatprep.subr.mxu0 0.0
    %927 = vmatpush1.msra.mxu0 %v822
    %928 = vmatprep.subr.mxu0 0.0
    %929 = vmatpush1.msra.mxu0 0.0
    %930 = vmatprep.subr.mxu0 0.0
    %931 = vmatpush1.msra.mxu0 0.0
    %932 = vmatprep.subr.mxu0 0.0
    %933 = vmatpush1.msra.mxu0 0.0
    %934 = vmatprep.subr.mxu0 0.0
    %935 = vmatpush1.msra.mxu0 0.0
    %936 = vmatprep.subr.mxu0 0.0
    %937 = vmatpush1.msra.mxu0 0.0
    %938 = vmatprep.subr.mxu0 0.0
    %939 = vmatpush1.msra.mxu0 0.0
    %940 = vmatprep.subr.mxu0 0.0
    %941 = vmatpush1.msra.mxu0 0.0
    %942 = vmatprep.subr.mxu0 0.0
    %943 = vmatpush1.msra.mxu0 0.0
    %944 = vmatprep.subr.mxu0 0.0
    %945 = vmatpush1.msra.mxu0 0.0
    %946 = vmatprep.subr.mxu0 0.0
    %947 = vmatpush1.msra.mxu0 0.0
    %948 = vmatprep.subr.mxu0 0.0
    %949 = vmatpush1.msra.mxu0 0.0
    %950 = vmatprep.subr.mxu0 0.0
    %951 = vmatpush1.msra.mxu0 0.0
    %952 = vmatprep.subr.mxu0 0.0
    %953 = vmatpush1.msra.mxu0 0.0
    %954 = vmatprep.subr.mxu0 0.0
    %955 = vmatpush1.msra.mxu0 0.0
    %956 = vmatprep.subr.mxu0 0.0
    %957 = vmatpush1.msra.mxu0 0.0
    %958 = vmatprep.subr.mxu0 0.0
    %959 = vmatpush1.msra.mxu0 0.0
    %960 = vmatprep.subr.mxu0 0.0
    %961 = vmatpush1.msra.mxu0 0.0
    %962 = vmatprep.subr.mxu0 0.0
    %963 = vmatpush1.msra.mxu0 0.0
    %964 = vmatprep.subr.mxu0 0.0
    %965 = vmatpush1.msra.mxu0 0.0
    %966 = vmatprep.subr.mxu0 0.0
    %967 = vmatpush1.msra.mxu0 0.0
    %968 = vmatprep.subr.mxu0 0.0
    %969 = vmatpush1.msra.mxu0 0.0
    %970 = vmatprep.subr.mxu0 0.0
    %971 = vmatpush1.msra.mxu0 0.0
    %972 = vmatprep.subr.mxu0 0.0
    %973 = vmatpush1.msra.mxu0 0.0
    %974 = vmatprep.subr.mxu0 0.0
    %975 = vmatpush1.msra.mxu0 0.0
    %976 = vmatprep.mubr.f32.mxu0 0.0
    %977 = vmatmul.mubr.f32.gmra.mrb[0].mxu0 %v907
    %v978 = vpop.f32.mrb[0].mxu0
    %v979 = vadd.f32 0.0, %v978
    %v980 = vpop.f32.mrb[0].mxu0
    %981 = vmatprep.mubr.f32.mxu0 0.0
    %982 = vmatmul.mubr.f32.gmra.mrb[0].mxu0 %v910
    %v983 = vpop.f32.mrb[0].mxu0
    %v984 = vadd.f32 0.0, %v983
    %v985 = vpop.f32.mrb[0].mxu0
    %986 = vdwg.mxu0
    %v987 = vrcp.pop %v898
    %v988 = vrcp.pop %v903
    %v989 = vmul.f32 %v979, %v987
    %v990 = vmul.f32 %v984, %v988
    %v991 = vadd.f32 %v989, %v552
    %v992 = vadd.f32 %v990, %v553
    %v993 = vld [vmem:[#allocation16] sm:$0xff]
    %v994 = vld [vmem:[#allocation16 + $0x8] sm:$0xff]
    %v995 = vld [vmem:[#allocation16 + $0x10] sm:$0xff]
    %v996 = vld [vmem:[#allocation16 + $0x18] sm:$0xff]
    %v997 = vld [vmem:[#allocation16 + $0x20] sm:$0xff]
    %v998 = vld [vmem:[#allocation16 + $0x28] sm:$0xff]
    %v999 = vld [vmem:[#allocation16 + $0x30] sm:$0xff]
    %v1000 = vld [vmem:[#allocation16 + $0x38] sm:$0xff]
    %v1001 = vld [vmem:[%s14] sm:$0x1]
    %v1003 = vlaneseq
    %v1004 = vshrl.u32 %v1003, 7
    %v1005 = vsub.s32 0, %v1004
    %v1006 = vrot.slane %v1001, %v1005
    %v1009 = vsel %vm199, %v991, 0
    %v1012 = vsel %vm199, %v992, 0
    %1014 = vmatprep.subr.mxu0 0.0
    %1015 = vmatpush1.msra.mxu0 %v993
    %1016 = vmatprep.subr.mxu0 0.0
    %1017 = vmatpush1.msra.mxu0 %v994
    %1018 = vmatprep.subr.mxu0 0.0
    %1019 = vmatpush1.msra.mxu0 %v995
    %1020 = vmatprep.subr.mxu0 0.0
    %1021 = vmatpush1.msra.mxu0 %v996
    %1022 = vmatprep.subr.mxu0 0.0
    %1023 = vmatpush1.msra.mxu0 %v997
    %1024 = vmatprep.subr.mxu0 0.0
    %1025 = vmatpush1.msra.mxu0 %v998
    %1026 = vmatprep.subr.mxu0 0.0
    %1027 = vmatpush1.msra.mxu0 %v999
    %1028 = vmatprep.subr.mxu0 0.0
    %1029 = vmatpush1.msra.mxu0 %v1000
    %1030 = vmatprep.subr.mxu0 0.0
    %1031 = vmatpush1.msra.mxu0 0.0
    %1032 = vmatprep.subr.mxu0 0.0
    %1033 = vmatpush1.msra.mxu0 0.0
    %1034 = vmatprep.subr.mxu0 0.0
    %1035 = vmatpush1.msra.mxu0 0.0
    %1036 = vmatprep.subr.mxu0 0.0
    %1037 = vmatpush1.msra.mxu0 0.0
    %1038 = vmatprep.subr.mxu0 0.0
    %1039 = vmatpush1.msra.mxu0 0.0
    %1040 = vmatprep.subr.mxu0 0.0
    %1041 = vmatpush1.msra.mxu0 0.0
    %1042 = vmatprep.subr.mxu0 0.0
    %1043 = vmatpush1.msra.mxu0 0.0
    %1044 = vmatprep.subr.mxu0 0.0
    %1045 = vmatpush1.msra.mxu0 0.0
    %1046 = vmatprep.subr.mxu0 0.0
    %1047 = vmatpush1.msra.mxu0 0.0
    %1048 = vmatprep.subr.mxu0 0.0
    %1049 = vmatpush1.msra.mxu0 0.0
    %1050 = vmatprep.subr.mxu0 0.0
    %1051 = vmatpush1.msra.mxu0 0.0
    %1052 = vmatprep.subr.mxu0 0.0
    %1053 = vmatpush1.msra.mxu0 0.0
    %1054 = vmatprep.subr.mxu0 0.0
    %1055 = vmatpush1.msra.mxu0 0.0
    %1056 = vmatprep.subr.mxu0 0.0
    %1057 = vmatpush1.msra.mxu0 0.0
    %1058 = vmatprep.subr.mxu0 0.0
    %1059 = vmatpush1.msra.mxu0 0.0
    %1060 = vmatprep.subr.mxu0 0.0
    %1061 = vmatpush1.msra.mxu0 0.0
    %1062 = vmatprep.subr.mxu0 0.0
    %1063 = vmatpush1.msra.mxu0 0.0
    %1064 = vmatprep.subr.mxu0 0.0
    %1065 = vmatpush1.msra.mxu0 0.0
    %1066 = vmatprep.subr.mxu0 0.0
    %1067 = vmatpush1.msra.mxu0 0.0
    %1068 = vmatprep.subr.mxu0 0.0
    %1069 = vmatpush1.msra.mxu0 0.0
    %1070 = vmatprep.subr.mxu0 0.0
    %1071 = vmatpush1.msra.mxu0 0.0
    %1072 = vmatprep.subr.mxu0 0.0
    %1073 = vmatpush1.msra.mxu0 0.0
    %1074 = vmatprep.subr.mxu0 0.0
    %1075 = vmatpush1.msra.mxu0 0.0
    %1076 = vmatprep.subr.mxu0 0.0
    %1077 = vmatpush1.msra.mxu0 0.0
    %1078 = vmatprep.mubr.f32.mxu0 0.0
    %1079 = vmatmul.mubr.f32.gmra.mrb[0].mxu0 %v1009
    %v1080 = vpop.f32.mrb[0].mxu0
    %v1081 = vadd.f32 %v1006, %v1080
    %v1082 = vpop.f32.mrb[0].mxu0
    %1083 = vmatprep.mubr.f32.mxu0 0.0
    %1084 = vmatmul.mubr.f32.gmra.mrb[0].mxu0 %v1012
    %v1085 = vpop.f32.mrb[0].mxu0
    %v1086 = vadd.f32 %v1006, %v1085
    %v1087 = vpop.f32.mrb[0].mxu0
    %1088 = vdwg.mxu0
    %v1089 = vmul.f32 %v1081, %v181
    %v1090 = vmul.f32 %v1086, %v182
    %1091 = vst.msk [vmem:[#allocation17] sm:$0xff] %vm199, %v1089
    %1092 = vst.msk [vmem:[#allocation17 + $0x8] sm:$0xff] %vm199, %v1090
    // Predicated region
    $region98: #{tpu_custom_call.1} parent=1 // pred_check
      _
    $region99: #{tpu_custom_call.1} parent=1 // pred_check_branch
      %1094 = sbr.rel (0) target = $region101
    $region100: #{tpu_custom_call.1} parent=1 // pred_region
      %s1096 = ssub.s32 256, 256
      %1097 = vsyncadd [#allocation4], %s1096
      %s1098 = sshll.u32 [#allocation17], 4
      %s1099 = int_to_ptr.vmem [resolvable:$true] %s1098
      %1104 = dma.vmem_to_hbm [thread:$0]  %s1099, 256, %s15, [#allocation4], 128, 128, 8
    $region101: #{tpu_custom_call.1} parent=1 // pred_fallthru
      _
    // Predicated region
    $region102: #{tpu_custom_call.1} parent=1 // pred_check
      _
    $region103: #{tpu_custom_call.1} parent=1 // pred_check_branch
      %1106 = sbr.rel (0) target = $region105
    $region104: #{tpu_custom_call.1} parent=1 // pred_region
      %1107 = dma.done [#allocation4], 256
    $region105: #{tpu_custom_call.1} parent=1 // pred_fallthru
      _
    %1108 = vsyncpa [#allocation3], 1
    %1109 = vsyncpa [#allocation6], 1
    %1110 = vsyncpa [#allocation9], 1
    %1111 = vsyncpa [#allocation12], 1
    %1112 = vsyncpa [#allocation15], 1
    %1113 = vsyncpa [#allocation4], 1

</llo_original>
